<compile_context>
chip_gen: v7x
topology: tpu7x:2x2x1
jax: 0.10.0
libtpu: 0.0.40
codegen_flags: <defaults>
</compile_context>

<pallas_src>
import functools

import jax
import jax.numpy as jnp
from jax.experimental import pallas as pl
from jax.experimental.pallas import tpu as pltpu

EPS = 1e-5
_VMEM_LIMIT_BYTES = 32 * 1024 * 1024


def _compiler_params():
    return pltpu.CompilerParams(
        dimension_semantics=("parallel", "parallel"),
        vmem_limit_bytes=_VMEM_LIMIT_BYTES)


# ---------------------------------- kernel ----------------------------------

def _conv_kernel(*refs, n_tiles, has_bn, has_halo):
    """Conv3x3 ('same', zero pad) on lane-dense rows + per-tile BN partial stats.

    refs (in order):
      core_ref                      (1, tile_rows, W*Cin)   auto-pipelined input tile
      [x_hbm_ref]                   full input in HBM (halo rows), only if has_halo
      [scale_ref, shift_ref]        (1, W*Cin) BN(prev)+ReLU folded scale/shift, if has_bn
      wb_ref                        (3, W*Cin, W*Cout) bf16 banded im2col weight (per dy)
      y_ref                         (1, tile_rows, W*Cout) raw conv output
      stats_ref                     (1, 1, 8, W*Cout): row0=sum, row1=sumsq, rest 0
      [halo_ref, sem_ref]           (2, W*Cin) scratch + DMA sems, only if has_halo
    """
    it = iter(refs)
    core_ref = next(it)
    x_hbm_ref = next(it) if has_halo else None
    scale_ref = next(it) if has_bn else None
    shift_ref = next(it) if has_bn else None
    wb_ref = next(it)
    y_ref = next(it)
    stats_ref = next(it)
    halo_ref = next(it) if has_halo else None
    sem_ref = next(it) if has_halo else None

    n = pl.program_id(0)
    t = pl.program_id(1)
    tile_rows = core_ref.shape[1]
    lanes_in = core_ref.shape[2]

    if has_bn:
        scale = scale_ref[...]                            # (1, W*Cin) f32
        shift = shift_ref[...]

        def act(v):                                       # BN(prev) + ReLU, f32 math
            return jnp.maximum(v.astype(jnp.float32) * scale + shift, 0.0)
    else:
        def act(v):
            return v.astype(jnp.float32)

    if has_halo:
        # Start the two 1-row halo DMAs first; the dy=1 matmul below overlaps them.
        h_total = x_hbm_ref.shape[1]
        r_top = jnp.maximum(t * tile_rows - 1, 0)
        r_bot = jnp.minimum((t + 1) * tile_rows, h_total - 1)
        cp_top = pltpu.make_async_copy(x_hbm_ref.at[n, pl.ds(r_top, 1)],
                                       halo_ref.at[pl.ds(0, 1)], sem_ref.at[0])
        cp_bot = pltpu.make_async_copy(x_hbm_ref.at[n, pl.ds(r_bot, 1)],
                                       halo_ref.at[pl.ds(1, 1)], sem_ref.at[1])
        cp_top.start()
        cp_bot.start()

    core = act(core_ref[0])                               # (tile_rows, W*Cin) f32
    core_bf = core.astype(jnp.bfloat16)
    # dy = 1 (center-row taps): no halo dependency -> runs while halo DMAs are in flight.
    y = jnp.dot(core_bf, wb_ref[1], preferred_element_type=jnp.float32)

    if has_halo:
        cp_top.wait()
        cp_bot.wait()
        halo = act(halo_ref[...])                         # (2, W*Cin) f32
        # Mask halo rows that fall outside the image (PyTorch zero padding); `act`
        # runs before the mask so out-of-image padding is exactly zero.
        top = halo[0:1] * jnp.where(t > 0, 1.0, 0.0)
        bot = halo[1:2] * jnp.where(t < n_tiles - 1, 1.0, 0.0)
    else:
        top = jnp.zeros((1, lanes_in), jnp.float32)
        bot = jnp.zeros((1, lanes_in), jnp.float32)

    # dy = 0: output row r reads input row r-1; dy = 2: reads row r+1.
    x_up = jnp.concatenate([top.astype(jnp.bfloat16), core_bf[:-1]], axis=0)
    x_dn = jnp.concatenate([core_bf[1:], bot.astype(jnp.bfloat16)], axis=0)
    y = y + jnp.dot(x_up, wb_ref[0], preferred_element_type=jnp.float32)
    y = y + jnp.dot(x_dn, wb_ref[2], preferred_element_type=jnp.float32)

    y_ref[...] = y.astype(y_ref.dtype).reshape(y_ref.shape)

    # Per-tile BN partial stats from the f32 accumulator, padded to a full 8-sublane block.
    s1 = jnp.sum(y, axis=0, keepdims=True)                # (1, W*Cout)
    s2 = jnp.sum(y * y, axis=0, keepdims=True)            # (1, W*Cout)
    pad = jnp.zeros((6, y.shape[1]), jnp.float32)
    stats_ref[...] = jnp.concatenate([s1, s2, pad], axis=0).reshape(stats_ref.shape)


# ------------------------------ wrapper helpers -------------------------------

def _build_banded_weight(w_hwio, width):
    """(3,3,ci,co) HWIO -> (3, width*ci, width*co): per-dy banded (dx-folded) weight."""
    blocks = []
    for dy in range(3):
        blk = None
        for dx in range(3):
            # Output column w reads input column w + dx - 1  ->  selector eye(k = 1 - dx).
            sel = jnp.eye(width, k=1 - dx, dtype=w_hwio.dtype)
            term = jnp.kron(sel, w_hwio[dy, dx])
            blk = term if blk is None else blk + term
        blocks.append(blk)
    return jnp.stack(blocks, axis=0)


def _lane_tile(v, width):
    """(co,) per-channel vector -> (1, width*co) lane-dense row (channel fastest)."""
    return jnp.tile(v.astype(jnp.float32), width).reshape(1, -1)


def _finalize_bn(stats, width, cout, count, gamma, beta):
    """Fold per-tile (sum, sumsq) partials into per-channel BN scale/shift (f32)."""
    s = stats.sum(axis=(0, 1))                            # (8, width*cout)
    s = s.reshape(8, width, cout).sum(axis=1)             # (8, cout)
    mean = s[0] / count
    var = s[1] / count - mean * mean                      # biased variance (PyTorch norm)
    scale = gamma.astype(jnp.float32) * jax.lax.rsqrt(var + EPS)
    shift = beta.astype(jnp.float32) - mean * scale
    return scale, shift


def _pick_tile_rows(h, max_rows=256):
    """Largest 8-aligned divisor of H that is <= max_rows, else the whole image."""
    cands = [d for d in range(1, h + 1) if h % d == 0 and d <= max_rows and d % 8 == 0]
    return max(cands) if cands else h


def _conv_call(x, bn_scale_shift, wb, *, ci, co, tile_rows, out_dtype):
    """One conv stage: conv3x3 (+ optional fused BN(prev)+ReLU) + per-tile BN partials."""
    n, h, lanes_in = x.shape
    width = lanes_in // ci
    lanes_out = width * co
    n_tiles = h // tile_rows
    has_halo = n_tiles > 1
    has_bn = bn_scale_shift is not None

    def const(shape):
        return pl.BlockSpec(shape, lambda nn, tt: (0,) * len(shape))

    in_specs = [pl.BlockSpec((1, tile_rows, lanes_in), lambda nn, tt: (nn, tt, 0))]
    args = [x]
    if has_halo:
        in_specs.append(pl.BlockSpec(memory_space=pl.ANY))   # HBM ref for halo rows
        args.append(x)
    if has_bn:
        scale_l, shift_l = bn_scale_shift
        in_specs += [const(scale_l.shape), const(shift_l.shape)]
        args += [scale_l, shift_l]
    in_specs.append(const(wb.shape))
    args.append(wb)

    scratch = []
    if has_halo:
        scratch = [pltpu.VMEM((2, lanes_in), x.dtype),
                   pltpu.SemaphoreType.DMA((2,))]

    grid_spec = pltpu.PrefetchScalarGridSpec(
        num_scalar_prefetch=0,
        grid=(n, n_tiles),
        in_specs=in_specs,
        out_specs=(
            pl.BlockSpec((1, tile_rows, lanes_out), lambda nn, tt: (nn, tt, 0)),
            pl.BlockSpec((1, 1, 8, lanes_out), lambda nn, tt: (nn, tt, 0, 0)),
        ),
        scratch_shapes=scratch,
    )
    kernel = functools.partial(_conv_kernel, n_tiles=n_tiles,
                               has_bn=has_bn, has_halo=has_halo)
    return pl.pallas_call(
        kernel,
        grid_spec=grid_spec,
        out_shape=(
            jax.ShapeDtypeStruct((n, h, lanes_out), out_dtype),          # raw conv output
            jax.ShapeDtypeStruct((n, n_tiles, 8, lanes_out), jnp.float32),  # BN partials
        ),
        compiler_params=_compiler_params(),
    )(*args)


@functools.partial(jax.jit, static_argnames=("tile_rows",))
def double_conv(x_nchw, w1, b1, g1, be1, w2, b2, g2, be2, *, tile_rows=None):
    """PyTorch-semantics DoubleConv forward. x_nchw: (N, Cin, H, W)."""
    n, cin, h, w = x_nchw.shape
    cout = w1.shape[-1]
    if tile_rows is None:
        tile_rows = _pick_tile_rows(h)
    assert h % tile_rows == 0, (h, tile_rows)
    count = float(n * h * w)

    # NCHW -> lane-dense (N, H, W*C): width x channels fuse onto the 128-lane axis.
    x = jnp.transpose(x_nchw.astype(jnp.float32), (0, 2, 3, 1)).reshape(n, h, w * cin)

    # Conv biases (b1, b2) are intentionally NOT applied: train-mode BatchNorm subtracts
    # the batch mean, which absorbs a per-channel bias exactly (output is identical).
    del b1, b2

    # Per-dy banded im2col weights (bf16 MXU operands).
    wb1 = _build_banded_weight(w1.astype(jnp.float32), w).astype(jnp.bfloat16)
    wb2 = _build_banded_weight(w2.astype(jnp.float32), w).astype(jnp.bfloat16)

    # K1: conv1 (+ per-tile BN1 partials). y1 stored bf16 (halves inter-stage HBM bytes).
    y1, st1 = _conv_call(x, None, wb1, ci=cin, co=cout,
                         tile_rows=tile_rows, out_dtype=jnp.bfloat16)
    scale1, shift1 = _finalize_bn(st1, w, cout, count, g1, be1)

    # K2: BN1+ReLU fused into conv2 (+ per-tile BN2 partials). y2 stays f32 (read once).
    y2, st2 = _conv_call(y1, (_lane_tile(scale1, w), _lane_tile(shift1, w)), wb2,
                         ci=cout, co=cout, tile_rows=tile_rows, out_dtype=jnp.float32)
    scale2, shift2 = _finalize_bn(st2, w, cout, count, g2, be2)

    # BN2 + ReLU as plain jnp: XLA fuses it with the mandatory NHWC->NCHW transpose.
    y2 = y2.reshape(n, h, w, cout)
    out = jnp.maximum(y2 * scale2[None, None, None, :] + shift2[None, None, None, :], 0.0)
    return jnp.transpose(out, (0, 3, 1, 2))


# ---------------- pure-JAX reference (for correctness check) ----------------
def ref_double_conv(x_nchw, w1, b1, g1, be1, w2, b2, g2, be2):
    def conv(x, wgt, b):
        wk = jnp.transpose(wgt, (3, 2, 0, 1))  # HWIO -> OIHW
        y = jax.lax.conv_general_dilated(
            x, wk, (1, 1), ((1, 1), (1, 1)),
            dimension_numbers=("NCHW", "OIHW", "NCHW"))
        return y + b[None, :, None, None]

    def bnrelu(y, g, be):
        mean = jnp.mean(y, axis=(0, 2, 3), keepdims=True)
        var = jnp.mean((y - mean) ** 2, axis=(0, 2, 3), keepdims=True)
        yh = (y - mean) / jnp.sqrt(var + EPS)
        return jnp.maximum(yh * g[None, :, None, None] + be[None, :, None, None], 0.0)

    y = bnrelu(conv(x_nchw, w1, b1), g1, be1)
    y = bnrelu(conv(y, w2, b2), g2, be2)
    return y


if __name__ == "__main__":
    N, CIN, COUT, H, W = 2, 4, 8, 32, 16   # W*COUT = 128 -> lane-dense output

    key = jax.random.PRNGKey(0)
    kx, k1, k2, k3, k4, k5, k6, k7, k8 = jax.random.split(key, 9)

    x = jax.random.normal(kx, (N, CIN, H, W), jnp.float32)

    # Conv weights generated in PyTorch (Cout, Cin, 3, 3) layout, stored as HWIO.
    w1 = jnp.transpose(
        jax.random.normal(k1, (COUT, CIN, 3, 3), jnp.float32) * 0.1, (2, 3, 1, 0))
    b1 = jax.random.normal(k2, (COUT,), jnp.float32) * 0.1
    w2 = jnp.transpose(
        jax.random.normal(k3, (COUT, COUT, 3, 3), jnp.float32) * 0.1, (2, 3, 1, 0))
    b2 = jax.random.normal(k4, (COUT,), jnp.float32) * 0.1

    # BatchNorm affine params (perturbed so the affine path is exercised).
    g1 = 1.0 + 0.1 * jax.random.normal(k5, (COUT,), jnp.float32)
    be1 = 0.1 * jax.random.normal(k6, (COUT,), jnp.float32)
    g2 = 1.0 + 0.1 * jax.random.normal(k7, (COUT,), jnp.float32)
    be2 = 0.1 * jax.random.normal(k8, (COUT,), jnp.float32)

    params = (w1, b1, g1, be1, w2, b2, g2, be2)
    ref = ref_double_conv(x, *params)

    # Default tiling: whole image per grid step (tile_rows = H, halo path compiled out).
    out = jax.block_until_ready(double_conv(x, *params))
    assert out.shape == (N, COUT, H, W), out.shape
    max_err = float(jnp.max(jnp.abs(out - ref)))
    # bf16 MXU operands + bf16 inter-stage tensor (f32 accumulate/stats) -> loose tolerance.
    assert jnp.allclose(out, ref, rtol=6e-2, atol=6e-2), max_err

    # Row-tiled run: exercises the overlapped halo-DMA path and cross-tile (global) BN stats.
    out2 = jax.block_until_ready(double_conv(x, *params, tile_rows=16))
    max_err2 = float(jnp.max(jnp.abs(out2 - ref)))
    assert jnp.allclose(out2, ref, rtol=6e-2, atol=6e-2), max_err2

    print("KERNEL_OK")
</pallas_src>

<mosaic_0001>
module attributes {stable_mosaic.version = 11 : i64} {
  func.func @_conv_kernel(%arg0: i32, %arg1: i32, %arg2: memref<1x32x64xf32, #tpu.memory_space<vmem>>, %arg3: memref<3x64x128xbf16, #tpu.memory_space<vmem>>, %arg4: memref<1x32x128xbf16, #tpu.memory_space<vmem>>, %arg5: memref<1x1x8x128xf32, #tpu.memory_space<vmem>>) attributes {dimension_semantics = [#tpu.dimension_semantics<parallel>, #tpu.dimension_semantics<parallel>], iteration_bounds = array<i64: 2, 1>, scalar_prefetch = 0 : i64, scratch_operands = 0 : i64, tpu.core_type = #tpu.core_type<tc>, window_params = [{transform_indices = @transform_0, window_bounds = array<i64: 1, 32, 64>}, {pipeline_mode = #tpu.pipeline_mode<synchronous>, transform_indices = @transform_1, window_bounds = array<i64: 3, 64, 128>}, {transform_indices = @transform_2, window_bounds = array<i64: 1, 32, 128>}, {transform_indices = @transform_3, window_bounds = array<i64: 1, 1, 8, 128>}]} {
    %c0 = arith.constant 0 : index
    %c0_0 = arith.constant 0 : index
    %c0_1 = arith.constant 0 : index
    %0 = vector.load %arg2[%c0, %c0_0, %c0_1] : memref<1x32x64xf32, #tpu.memory_space<vmem>>, vector<1x32x64xf32>
    %1 = vector.shape_cast %0 : vector<1x32x64xf32> to vector<32x64xf32>
    %2 = arith.truncf %1 : vector<32x64xf32> to vector<32x64xbf16>
    %c1 = arith.constant 1 : index
    %c0_2 = arith.constant 0 : index
    %c0_3 = arith.constant 0 : index
    %3 = vector.load %arg3[%c1, %c0_2, %c0_3] : memref<3x64x128xbf16, #tpu.memory_space<vmem>>, vector<1x64x128xbf16>
    %4 = vector.shape_cast %3 : vector<1x64x128xbf16> to vector<64x128xbf16>
    %cst = arith.constant dense<0.000000e+00> : vector<32x128xf32>
    %5 = tpu.matmul %2, %4, %cst {dimension_numbers = #tpu.dot_dimension_numbers<[1], [0], [0], [1], [0, 0, 1, 1], [], []>} : vector<32x64xbf16>, vector<64x128xbf16>, vector<32x128xf32> -> vector<32x128xf32>
    %cst_4 = arith.constant 0.000000e+00 : f32
    %6 = vector.broadcast %cst_4 : f32 to vector<1x64xf32>
    %cst_5 = arith.constant 0.000000e+00 : f32
    %7 = vector.broadcast %cst_5 : f32 to vector<1x64xf32>
    %8 = arith.truncf %6 : vector<1x64xf32> to vector<1x64xbf16>
    %9 = vector.extract_strided_slice %2 {offsets = [0, 0], sizes = [31, 64], strides = [1, 1]} : vector<32x64xbf16> to vector<31x64xbf16>
    %10 = tpu.concatenate %8, %9 in 0 : vector<1x64xbf16>, vector<31x64xbf16> -> vector<32x64xbf16>
    %11 = vector.extract_strided_slice %2 {offsets = [1, 0], sizes = [31, 64], strides = [1, 1]} : vector<32x64xbf16> to vector<31x64xbf16>
    %12 = arith.truncf %7 : vector<1x64xf32> to vector<1x64xbf16>
    %13 = tpu.concatenate %11, %12 in 0 : vector<31x64xbf16>, vector<1x64xbf16> -> vector<32x64xbf16>
    %c0_6 = arith.constant 0 : index
    %c0_7 = arith.constant 0 : index
    %c0_8 = arith.constant 0 : index
    %14 = vector.load %arg3[%c0_6, %c0_7, %c0_8] : memref<3x64x128xbf16, #tpu.memory_space<vmem>>, vector<1x64x128xbf16>
    %15 = vector.shape_cast %14 : vector<1x64x128xbf16> to vector<64x128xbf16>
    %cst_9 = arith.constant dense<0.000000e+00> : vector<32x128xf32>
    %16 = tpu.matmul %10, %15, %cst_9 {dimension_numbers = #tpu.dot_dimension_numbers<[1], [0], [0], [1], [0, 0, 1, 1], [], []>} : vector<32x64xbf16>, vector<64x128xbf16>, vector<32x128xf32> -> vector<32x128xf32>
    %17 = arith.addf %5, %16 : vector<32x128xf32>
    %c2 = arith.constant 2 : index
    %c0_10 = arith.constant 0 : index
    %c0_11 = arith.constant 0 : index
    %18 = vector.load %arg3[%c2, %c0_10, %c0_11] : memref<3x64x128xbf16, #tpu.memory_space<vmem>>, vector<1x64x128xbf16>
    %19 = vector.shape_cast %18 : vector<1x64x128xbf16> to vector<64x128xbf16>
    %cst_12 = arith.constant dense<0.000000e+00> : vector<32x128xf32>
    %20 = tpu.matmul %13, %19, %cst_12 {dimension_numbers = #tpu.dot_dimension_numbers<[1], [0], [0], [1], [0, 0, 1, 1], [], []>} : vector<32x64xbf16>, vector<64x128xbf16>, vector<32x128xf32> -> vector<32x128xf32>
    %21 = arith.addf %17, %20 : vector<32x128xf32>
    %22 = arith.truncf %21 : vector<32x128xf32> to vector<32x128xbf16>
    %23 = vector.shape_cast %22 : vector<32x128xbf16> to vector<1x32x128xbf16>
    %c0_13 = arith.constant 0 : index
    %c0_14 = arith.constant 0 : index
    %c0_15 = arith.constant 0 : index
    %24 = vector.load %arg4[%c0_13, %c0_14, %c0_15] : memref<1x32x128xbf16, #tpu.memory_space<vmem>>, vector<1x32x128xbf16>
    tpu.vector_store %arg4[%c0_13, %c0_14, %c0_15], %23 {strides = array<i32>} : memref<1x32x128xbf16, #tpu.memory_space<vmem>>, vector<1x32x128xbf16>,
    %cst_16 = arith.constant dense<0.000000e+00> : vector<128xf32>
    %25 = vector.multi_reduction <add>, %21, %cst_16 [0] : vector<32x128xf32> to vector<128xf32>
    %26 = vector.shape_cast %25 : vector<128xf32> to vector<1x128xf32>
    %27 = arith.mulf %21, %21 : vector<32x128xf32>
    %cst_17 = arith.constant dense<0.000000e+00> : vector<128xf32>
    %28 = vector.multi_reduction <add>, %27, %cst_17 [0] : vector<32x128xf32> to vector<128xf32>
    %29 = vector.shape_cast %28 : vector<128xf32> to vector<1x128xf32>
    %cst_18 = arith.constant 0.000000e+00 : f32
    %30 = vector.broadcast %cst_18 : f32 to vector<6x128xf32>
    %31 = tpu.concatenate %26, %29, %30 in 0 : vector<1x128xf32>, vector<1x128xf32>, vector<6x128xf32> -> vector<8x128xf32>
    %32 = vector.shape_cast %31 : vector<8x128xf32> to vector<1x1x8x128xf32>
    %c0_19 = arith.constant 0 : index
    %c0_20 = arith.constant 0 : index
    %c0_21 = arith.constant 0 : index
    %c0_22 = arith.constant 0 : index
    %33 = vector.load %arg5[%c0_19, %c0_20, %c0_21, %c0_22] : memref<1x1x8x128xf32, #tpu.memory_space<vmem>>, vector<1x1x8x128xf32>
    tpu.vector_store %arg5[%c0_19, %c0_20, %c0_21, %c0_22], %32 {strides = array<i32>} : memref<1x1x8x128xf32, #tpu.memory_space<vmem>>, vector<1x1x8x128xf32>,
    return
  }
  func.func @transform_0(%arg0: i32, %arg1: i32) -> (i32, i32, i32) {
    %c0_i32 = arith.constant 0 : i32
    %c0_i32_0 = arith.constant 0 : i32
    return %arg0, %arg1, %c0_i32 : i32, i32, i32
  }
  func.func @transform_1(%arg0: i32, %arg1: i32) -> (i32, i32, i32) {
    %c0_i32 = arith.constant 0 : i32
    %c0_i32_0 = arith.constant 0 : i32
    %c0_i32_1 = arith.constant 0 : i32
    %c0_i32_2 = arith.constant 0 : i32
    return %c0_i32, %c0_i32_0, %c0_i32_1 : i32, i32, i32
  }
  func.func @transform_2(%arg0: i32, %arg1: i32) -> (i32, i32, i32) {
    %c0_i32 = arith.constant 0 : i32
    %c0_i32_0 = arith.constant 0 : i32
    return %arg0, %arg1, %c0_i32 : i32, i32, i32
  }
  func.func @transform_3(%arg0: i32, %arg1: i32) -> (i32, i32, i32, i32) {
    %c0_i32 = arith.constant 0 : i32
    %c0_i32_0 = arith.constant 0 : i32
    %c0_i32_1 = arith.constant 0 : i32
    return %arg0, %arg1, %c0_i32, %c0_i32_0 : i32, i32, i32, i32
  }
}

module attributes {stable_mosaic.version = 11 : i64} {
  func.func @_conv_kernel(%arg0: i32, %arg1: i32, %arg2: memref<1x32x128xbf16, #tpu.memory_space<vmem>>, %arg3: memref<1x128xf32, #tpu.memory_space<vmem>>, %arg4: memref<1x128xf32, #tpu.memory_space<vmem>>, %arg5: memref<3x128x128xbf16, #tpu.memory_space<vmem>>, %arg6: memref<1x32x128xf32, #tpu.memory_space<vmem>>, %arg7: memref<1x1x8x128xf32, #tpu.memory_space<vmem>>) attributes {dimension_semantics = [#tpu.dimension_semantics<parallel>, #tpu.dimension_semantics<parallel>], iteration_bounds = array<i64: 2, 1>, scalar_prefetch = 0 : i64, scratch_operands = 0 : i64, tpu.core_type = #tpu.core_type<tc>, window_params = [{transform_indices = @transform_0, window_bounds = array<i64: 1, 32, 128>}, {pipeline_mode = #tpu.pipeline_mode<synchronous>, transform_indices = @transform_1, window_bounds = array<i64: 1, 128>}, {pipeline_mode = #tpu.pipeline_mode<synchronous>, transform_indices = @transform_2, window_bounds = array<i64: 1, 128>}, {pipeline_mode = #tpu.pipeline_mode<synchronous>, transform_indices = @transform_3, window_bounds = array<i64: 3, 128, 128>}, {transform_indices = @transform_4, window_bounds = array<i64: 1, 32, 128>}, {transform_indices = @transform_5, window_bounds = array<i64: 1, 1, 8, 128>}]} {
    %c0 = arith.constant 0 : index
    %c0_0 = arith.constant 0 : index
    %0 = vector.load %arg3[%c0, %c0_0] : memref<1x128xf32, #tpu.memory_space<vmem>>, vector<1x128xf32>
    %c0_1 = arith.constant 0 : index
    %c0_2 = arith.constant 0 : index
    %1 = vector.load %arg4[%c0_1, %c0_2] : memref<1x128xf32, #tpu.memory_space<vmem>>, vector<1x128xf32>
    %c0_3 = arith.constant 0 : index
    %c0_4 = arith.constant 0 : index
    %c0_5 = arith.constant 0 : index
    %2 = vector.load %arg2[%c0_3, %c0_4, %c0_5] : memref<1x32x128xbf16, #tpu.memory_space<vmem>>, vector<1x32x128xbf16>
    %3 = vector.shape_cast %2 : vector<1x32x128xbf16> to vector<32x128xbf16>
    %4 = arith.extf %3 : vector<32x128xbf16> to vector<32x128xf32>
    %5 = vector.broadcast %0 : vector<1x128xf32> to vector<32x128xf32>
    %6 = arith.mulf %4, %5 : vector<32x128xf32>
    %7 = vector.broadcast %1 : vector<1x128xf32> to vector<32x128xf32>
    %8 = arith.addf %6, %7 : vector<32x128xf32>
    %cst = arith.constant 0.000000e+00 : f32
    %9 = vector.broadcast %cst : f32 to vector<32x128xf32>
    %10 = arith.maximumf %8, %9 : vector<32x128xf32>
    %11 = arith.truncf %10 : vector<32x128xf32> to vector<32x128xbf16>
    %c1 = arith.constant 1 : index
    %c0_6 = arith.constant 0 : index
    %c0_7 = arith.constant 0 : index
    %12 = vector.load %arg5[%c1, %c0_6, %c0_7] : memref<3x128x128xbf16, #tpu.memory_space<vmem>>, vector<1x128x128xbf16>
    %13 = vector.shape_cast %12 : vector<1x128x128xbf16> to vector<128x128xbf16>
    %cst_8 = arith.constant dense<0.000000e+00> : vector<32x128xf32>
    %14 = tpu.matmul %11, %13, %cst_8 {dimension_numbers = #tpu.dot_dimension_numbers<[1], [0], [0], [1], [0, 0, 1, 1], [], []>} : vector<32x128xbf16>, vector<128x128xbf16>, vector<32x128xf32> -> vector<32x128xf32>
    %cst_9 = arith.constant 0.000000e+00 : f32
    %15 = vector.broadcast %cst_9 : f32 to vector<1x128xf32>
    %cst_10 = arith.constant 0.000000e+00 : f32
    %16 = vector.broadcast %cst_10 : f32 to vector<1x128xf32>
    %17 = arith.truncf %15 : vector<1x128xf32> to vector<1x128xbf16>
    %18 = vector.extract_strided_slice %11 {offsets = [0, 0], sizes = [31, 128], strides = [1, 1]} : vector<32x128xbf16> to vector<31x128xbf16>
    %19 = tpu.concatenate %17, %18 in 0 : vector<1x128xbf16>, vector<31x128xbf16> -> vector<32x128xbf16>
    %20 = vector.extract_strided_slice %11 {offsets = [1, 0], sizes = [31, 128], strides = [1, 1]} : vector<32x128xbf16> to vector<31x128xbf16>
    %21 = arith.truncf %16 : vector<1x128xf32> to vector<1x128xbf16>
    %22 = tpu.concatenate %20, %21 in 0 : vector<31x128xbf16>, vector<1x128xbf16> -> vector<32x128xbf16>
    %c0_11 = arith.constant 0 : index
    %c0_12 = arith.constant 0 : index
    %c0_13 = arith.constant 0 : index
    %23 = vector.load %arg5[%c0_11, %c0_12, %c0_13] : memref<3x128x128xbf16, #tpu.memory_space<vmem>>, vector<1x128x128xbf16>
    %24 = vector.shape_cast %23 : vector<1x128x128xbf16> to vector<128x128xbf16>
    %cst_14 = arith.constant dense<0.000000e+00> : vector<32x128xf32>
    %25 = tpu.matmul %19, %24, %cst_14 {dimension_numbers = #tpu.dot_dimension_numbers<[1], [0], [0], [1], [0, 0, 1, 1], [], []>} : vector<32x128xbf16>, vector<128x128xbf16>, vector<32x128xf32> -> vector<32x128xf32>
    %26 = arith.addf %14, %25 : vector<32x128xf32>
    %c2 = arith.constant 2 : index
    %c0_15 = arith.constant 0 : index
    %c0_16 = arith.constant 0 : index
    %27 = vector.load %arg5[%c2, %c0_15, %c0_16] : memref<3x128x128xbf16, #tpu.memory_space<vmem>>, vector<1x128x128xbf16>
    %28 = vector.shape_cast %27 : vector<1x128x128xbf16> to vector<128x128xbf16>
    %cst_17 = arith.constant dense<0.000000e+00> : vector<32x128xf32>
    %29 = tpu.matmul %22, %28, %cst_17 {dimension_numbers = #tpu.dot_dimension_numbers<[1], [0], [0], [1], [0, 0, 1, 1], [], []>} : vector<32x128xbf16>, vector<128x128xbf16>, vector<32x128xf32> -> vector<32x128xf32>
    %30 = arith.addf %26, %29 : vector<32x128xf32>
    %31 = vector.shape_cast %30 : vector<32x128xf32> to vector<1x32x128xf32>
    %c0_18 = arith.constant 0 : index
    %c0_19 = arith.constant 0 : index
    %c0_20 = arith.constant 0 : index
    %32 = vector.load %arg6[%c0_18, %c0_19, %c0_20] : memref<1x32x128xf32, #tpu.memory_space<vmem>>, vector<1x32x128xf32>
    tpu.vector_store %arg6[%c0_18, %c0_19, %c0_20], %31 {strides = array<i32>} : memref<1x32x128xf32, #tpu.memory_space<vmem>>, vector<1x32x128xf32>,
    %cst_21 = arith.constant dense<0.000000e+00> : vector<128xf32>
    %33 = vector.multi_reduction <add>, %30, %cst_21 [0] : vector<32x128xf32> to vector<128xf32>
    %34 = vector.shape_cast %33 : vector<128xf32> to vector<1x128xf32>
    %35 = arith.mulf %30, %30 : vector<32x128xf32>
    %cst_22 = arith.constant dense<0.000000e+00> : vector<128xf32>
    %36 = vector.multi_reduction <add>, %35, %cst_22 [0] : vector<32x128xf32> to vector<128xf32>
    %37 = vector.shape_cast %36 : vector<128xf32> to vector<1x128xf32>
    %cst_23 = arith.constant 0.000000e+00 : f32
    %38 = vector.broadcast %cst_23 : f32 to vector<6x128xf32>
    %39 = tpu.concatenate %34, %37, %38 in 0 : vector<1x128xf32>, vector<1x128xf32>, vector<6x128xf32> -> vector<8x128xf32>
    %40 = vector.shape_cast %39 : vector<8x128xf32> to vector<1x1x8x128xf32>
    %c0_24 = arith.constant 0 : index
    %c0_25 = arith.constant 0 : index
    %c0_26 = arith.constant 0 : index
    %c0_27 = arith.constant 0 : index
    %41 = vector.load %arg7[%c0_24, %c0_25, %c0_26, %c0_27] : memref<1x1x8x128xf32, #tpu.memory_space<vmem>>, vector<1x1x8x128xf32>
    tpu.vector_store %arg7[%c0_24, %c0_25, %c0_26, %c0_27], %40 {strides = array<i32>} : memref<1x1x8x128xf32, #tpu.memory_space<vmem>>, vector<1x1x8x128xf32>,
    return
  }
  func.func @transform_0(%arg0: i32, %arg1: i32) -> (i32, i32, i32) {
    %c0_i32 = arith.constant 0 : i32
    %c0_i32_0 = arith.constant 0 : i32
    return %arg0, %arg1, %c0_i32 : i32, i32, i32
  }
  func.func @transform_1(%arg0: i32, %arg1: i32) -> (i32, i32) {
    %c0_i32 = arith.constant 0 : i32
    %c0_i32_0 = arith.constant 0 : i32
    %c0_i32_1 = arith.constant 0 : i32
    return %c0_i32, %c0_i32_0 : i32, i32
  }
  func.func @transform_2(%arg0: i32, %arg1: i32) -> (i32, i32) {
    %c0_i32 = arith.constant 0 : i32
    %c0_i32_0 = arith.constant 0 : i32
    %c0_i32_1 = arith.constant 0 : i32
    return %c0_i32, %c0_i32_0 : i32, i32
  }
  func.func @transform_3(%arg0: i32, %arg1: i32) -> (i32, i32, i32) {
    %c0_i32 = arith.constant 0 : i32
    %c0_i32_0 = arith.constant 0 : i32
    %c0_i32_1 = arith.constant 0 : i32
    %c0_i32_2 = arith.constant 0 : i32
    return %c0_i32, %c0_i32_0, %c0_i32_1 : i32, i32, i32
  }
  func.func @transform_4(%arg0: i32, %arg1: i32) -> (i32, i32, i32) {
    %c0_i32 = arith.constant 0 : i32
    %c0_i32_0 = arith.constant 0 : i32
    return %arg0, %arg1, %c0_i32 : i32, i32, i32
  }
  func.func @transform_5(%arg0: i32, %arg1: i32) -> (i32, i32, i32, i32) {
    %c0_i32 = arith.constant 0 : i32
    %c0_i32_0 = arith.constant 0 : i32
    %c0_i32_1 = arith.constant 0 : i32
    return %arg0, %arg1, %c0_i32, %c0_i32_0 : i32, i32, i32, i32
  }
}

</mosaic_0001>

<llo_original>
// kernel: double_conv.2
$region0: #{double_conv.2}
  #allocation0 [shape = 'u32[]', space=smem, size = 0x4, offset = 0x4, fixed_abs, tag = 'smem constant byte address 0x4 - core index']
  #allocation1 [shape = 'u32[144,128]{1,0:T(1,128)}', space=vmem, size = 0x12000, scoped, tag = 'internal scratch']
  %s0 = inlined_call_operand.vmem [shape: f32[2,32,64], index: 0, kind: input, shape index: {}]
  %s1 = inlined_call_operand.vmem [shape: bf16[3,64,128], index: 1, kind: input, shape index: {}]
  %s2 = inlined_call_operand.vmem [shape: bf16[2,32,128], index: 2, kind: output, shape index: {0}]
  %s3 = inlined_call_operand.vmem [shape: f32[2,1,8,128], index: 3, kind: output, shape index: {1}]
  %4 = xla_tuple %s2, %s3
  %s5 = sld [smem:[#allocation0]]
  $region49: #{double_conv.2} parent=0
    _
  %s7 = ssub.s32 1, %s5
  %s8 = scalar_select 0, %s7, %s5
  loop: start=0, step=1, limit=4
  $region2: #{double_conv.2} parent=0 // loop_pre_header
    _
  $region3: #{double_conv.2} parent=0 // loop_header
    %s10 = sphi 0, %s14
    %p11 = scmp.ge.s32.totalorder %s10, 4
    %s17 = sphi 0, %s29
    %s18 = sphi 0, %s25
    %s19 = sphi 0, %s17
    %s20 = sphi 0, %s18
    %s21 = sphi 0, %s19
    %s22 = sphi 0, %s20
    %s34 = sphi 0, %s36
    %s37 = sphi 0, %s34
    %s38 = sphi 0, %s37
    %s54 = sphi 0, %s38
    %s58 = sphi 0, %s58
    %s60 = sphi 0, %s58
    %s61 = sphi 0, %s60
    %s75 = sphi 0, %s61
    %s83 = sphi 0, %s85
    %s86 = sphi 0, %s83
    %s87 = sphi 0, %s86
    %s103 = sphi 0, %s87
    %s111 = sphi 0, %s113
    %s114 = sphi 0, %s111
    %s115 = sphi 0, %s114
    %s131 = sphi 0, %s115
  $region4: #{double_conv.2} parent=0 // loop_header_branch
    %13 = sbr.rel (%p11) target = $region8
  $region5: #{double_conv.2} parent=0 // loop_body
    %s15 = ssub.s32 %s10, 1
    %s16 = ssub.s32 %s10, 2
    %s23 = sadd.s32 1, %s18
    %p24 = scmp.ge.s32.totalorder %s23, 1
    %s25 = scalar_select %p24, 0, %s23
    %s26 = sadd.s32 1, %s17
    %s27 = scalar_select %p24, %s26, %s17
    %p28 = scmp.ge.s32.totalorder %s27, 2
    %s29 = scalar_select %p28, 0, %s27
    %s30 = ssub.s32 %s17, %s29
    %s31 = ssub.s32 %s18, %s25
    %s32 = sor.u32 %s30, %s31
    %p33 = scmp.eq.s32.totalorder %s32, 0
    %s35 = sadd.s32 %s34, 1
    %s36 = scalar_select %p33, %s34, %s35
    %p39 = pneg %p33
    %p40 = scmp.eq.s32.totalorder %s10, 1
    %p41 = por %p39, %p40
    %p42 = scmp.ne.s32.totalorder %s34, %s37
    %p43 = scmp.eq.s32.totalorder %s10, 0
    %p44 = por %p42, %p43
    %p45 = scmp.ne.s32.totalorder %s34, %s37
    %p46 = scmp.eq.s32.totalorder %s15, 1
    %p47 = por %p45, %p46
    %p48 = scmp.ne.s32.totalorder %s37, %s38
    %p49 = scmp.eq.s32.totalorder %s15, 0
    %p50 = por %p48, %p49
    %p51 = scmp.ne.s32.totalorder %s37, %s38
    %p52 = scmp.eq.s32.totalorder %s16, 1
    %p53 = por %p51, %p52
    %p55 = scmp.ne.s32.totalorder %s38, %s54
    %p56 = scmp.eq.s32.totalorder %s16, 0
    %p57 = por %p55, %p56
    %s59 = sadd.s32 %s58, 1
    %p62 = scmp.eq.s32.totalorder %s10, 1
    %p63 = scmp.ne.s32.totalorder %s58, %s60
    %p64 = scmp.eq.s32.totalorder %s10, 0
    %p65 = por %p63, %p64
    %p66 = scmp.ne.s32.totalorder %s58, %s60
    %p67 = scmp.eq.s32.totalorder %s15, 1
    %p68 = por %p66, %p67
    %p69 = scmp.ne.s32.totalorder %s60, %s61
    %p70 = scmp.eq.s32.totalorder %s15, 0
    %p71 = por %p69, %p70
    %p72 = scmp.ne.s32.totalorder %s60, %s61
    %p73 = scmp.eq.s32.totalorder %s16, 1
    %p74 = por %p72, %p73
    %p76 = scmp.ne.s32.totalorder %s61, %s75
    %p77 = scmp.eq.s32.totalorder %s16, 0
    %p78 = por %p76, %p77
    %s79 = ssub.s32 %s17, %s29
    %s80 = ssub.s32 %s18, %s25
    %s81 = sor.u32 %s79, %s80
    %p82 = scmp.eq.s32.totalorder %s81, 0
    %s84 = sadd.s32 %s83, 1
    %s85 = scalar_select %p82, %s83, %s84
    %p88 = pneg %p82
    %p89 = scmp.eq.s32.totalorder %s10, 1
    %p90 = por %p88, %p89
    %p91 = scmp.ne.s32.totalorder %s83, %s86
    %p92 = scmp.eq.s32.totalorder %s10, 0
    %p93 = por %p91, %p92
    %p94 = scmp.ne.s32.totalorder %s83, %s86
    %p95 = scmp.eq.s32.totalorder %s15, 1
    %p96 = por %p94, %p95
    %p97 = scmp.ne.s32.totalorder %s86, %s87
    %p98 = scmp.eq.s32.totalorder %s15, 0
    %p99 = por %p97, %p98
    %p100 = scmp.ne.s32.totalorder %s86, %s87
    %p101 = scmp.eq.s32.totalorder %s16, 1
    %p102 = por %p100, %p101
    %p104 = scmp.ne.s32.totalorder %s87, %s103
    %p105 = scmp.eq.s32.totalorder %s16, 0
    %p106 = por %p104, %p105
    %s107 = ssub.s32 %s17, %s29
    %s108 = ssub.s32 %s18, %s25
    %s109 = sor.u32 %s107, %s108
    %p110 = scmp.eq.s32.totalorder %s109, 0
    %s112 = sadd.s32 %s111, 1
    %s113 = scalar_select %p110, %s111, %s112
    %p116 = pneg %p110
    %p117 = scmp.eq.s32.totalorder %s10, 1
    %p118 = por %p116, %p117
    %p119 = scmp.ne.s32.totalorder %s111, %s114
    %p120 = scmp.eq.s32.totalorder %s10, 0
    %p121 = por %p119, %p120
    %p122 = scmp.ne.s32.totalorder %s111, %s114
    %p123 = scmp.eq.s32.totalorder %s15, 1
    %p124 = por %p122, %p123
    %p125 = scmp.ne.s32.totalorder %s114, %s115
    %p126 = scmp.eq.s32.totalorder %s15, 0
    %p127 = por %p125, %p126
    %p128 = scmp.ne.s32.totalorder %s114, %s115
    %p129 = scmp.eq.s32.totalorder %s16, 1
    %p130 = por %p128, %p129
    %p132 = scmp.ne.s32.totalorder %s115, %s131
    %p133 = scmp.eq.s32.totalorder %s16, 0
    %p134 = por %p132, %p133
    %p135 = scmp.le.s32.totalorder 1, %s10
    %p136 = scmp.lt.s32.totalorder %s10, 3
    %p137 = pnand %p135, %p136
    %p138 = pneg %p137
    // Predicated region
    $region9: #{double_conv.2} parent=5 // pred_check
      _
    $region10: #{double_conv.2} parent=5 // pred_check_branch
      %140 = sbr.rel (%p137) target = $region12
    $region11: #{double_conv.2} parent=5 // pred_region
      %s141 = ssub.s32 %s10, 1
      // Predicated region
      $region13: #{double_conv.2} parent=11 // pred_check
        %p142 = pneg %p71
      $region14: #{double_conv.2} parent=11 // pred_check_branch
        %144 = sbr.rel (%p142) target = $region16
      $region15: #{double_conv.2} parent=11 // pred_region
        _
      $region16: #{double_conv.2} parent=11 // pred_fallthru
        _
    $region12: #{double_conv.2} parent=5 // pred_fallthru
      _
    %p145 = scmp.lt.s32.totalorder %s10, 2
    // Predicated region
    $region17: #{double_conv.2} parent=5 // pred_check
      %p146 = pneg %p145
    $region18: #{double_conv.2} parent=5 // pred_check_branch
      %148 = sbr.rel (%p146) target = $region20
    $region19: #{double_conv.2} parent=5 // pred_region
      // Predicated region
      $region21: #{double_conv.2} parent=19 // pred_check
        %p149 = pneg %p44
      $region22: #{double_conv.2} parent=19 // pred_check_branch
        %151 = sbr.rel (%p149) target = $region24
      $region23: #{double_conv.2} parent=19 // pred_region
        %s152 = smul.u32 4, %s18
        %p153 = scmp.lt.s32.totalorder %s17, 1
        %s154 = scalar_select %p153, %s17, 1
        %p155 = scmp.lt.s32.totalorder %s152, 3
        %s156 = scalar_select %p155, %s152, 3
        %s157 = smul.addr %s154, 4
        %s158 = sadd.s32 %s156, %s157
        %s159 = smul.addr %s158, 8
        %s160 = scalar_lea.vmem %s0, %s159
        %s161 = smul.u32 4, %s18
      $region24: #{double_conv.2} parent=19 // pred_fallthru
        _
    $region20: #{double_conv.2} parent=5 // pred_fallthru
      _
    %p162 = scmp.le.s32.totalorder 1, %s10
    %p163 = scmp.lt.s32.totalorder %s10, 3
    %p164 = pnand %p162, %p163
    %p165 = pneg %p164
    // Predicated region
    $region25: #{double_conv.2} parent=5 // pred_check
      _
    $region26: #{double_conv.2} parent=5 // pred_check_branch
      %167 = sbr.rel (%p164) target = $region28
    $region27: #{double_conv.2} parent=5 // pred_region
      %s168 = ssub.s32 %s10, 1
      %s169 = smul.u32 4, %s20
      %p170 = scmp.lt.s32.totalorder %s19, 1
      %s171 = scalar_select %p170, %s19, 1
      %p172 = scmp.lt.s32.totalorder %s169, 3
      %s173 = scalar_select %p172, %s169, 3
      %s174 = smul.addr %s171, 4
      %s175 = sadd.s32 %s173, %s174
      %s176 = smul.addr %s175, 8
      %s177 = scalar_lea.vmem %s0, %s176
      %p178 = pneg %p50
      %p179 = pneg %p47
      %p180 = pneg %p71
      %p181 = pneg %p68
      %p182 = pneg %p99
      %p183 = pneg %p96
      %s184 = smul.u32 4, %s20
      %p185 = scmp.lt.s32.totalorder %s19, 1
      %s186 = scalar_select %p185, %s19, 1
      %p187 = scmp.lt.s32.totalorder %s184, 3
      %s188 = scalar_select %p187, %s184, 3
      %s189 = smul.addr %s186, 4
      %s190 = sadd.s32 %s188, %s189
      %s191 = smul.addr %s190, 4
      %s192 = scalar_lea.vmem %s2, %s191
      %p193 = pneg %p127
      %p194 = pneg %p124
      %p195 = scmp.lt.s32.totalorder %s19, 1
      %s196 = scalar_select %p195, %s19, 1
      %p197 = scmp.lt.s32.totalorder %s20, 0
      %s198 = scalar_select %p197, %s20, 0
      %s199 = sadd.s32 %s198, %s196
      %s200 = smul.addr %s199, 8
      %s201 = scalar_lea.vmem %s3, %s200
      %s202 = smul.u32 4, %s20
      %p203 = scmp.lt.s32.totalorder %s19, 1
      %s204 = scalar_select %p203, %s19, 1
      %p205 = scmp.lt.s32.totalorder %s202, 3
      %s206 = scalar_select %p205, %s202, 3
      %s207 = smul.addr %s204, 4
      %s208 = sadd.s32 %s206, %s207
      %s209 = smul.addr %s208, 8
      %s210 = scalar_lea.vmem %s0, %s209
      %s211 = smul.u32 4, %s20
      %s212 = smul.u32 4, %s20
      %p213 = scmp.lt.s32.totalorder %s19, 1
      %s214 = scalar_select %p213, %s19, 1
      %p215 = scmp.lt.s32.totalorder %s212, 3
      %s216 = scalar_select %p215, %s212, 3
      %s217 = smul.addr %s214, 4
      %s218 = sadd.s32 %s216, %s217
      %s219 = smul.addr %s218, 4
      %s220 = scalar_lea.vmem %s2, %s219
      %s221 = smul.u32 4, %s20
      %p222 = scmp.lt.s32.totalorder %s19, 1
      %s223 = scalar_select %p222, %s19, 1
      %p224 = scmp.lt.s32.totalorder %s20, 0
      %s225 = scalar_select %p224, %s20, 0
      %s226 = sadd.s32 %s225, %s223
      %s227 = smul.addr %s226, 8
      %s228 = scalar_lea.vmem %s3, %s227
      %v230 = vld [vmem:[%s210] sm:$0xff]
      %v231 = vld [vmem:[%s210 + $0x8] sm:$0xff]
      %v232 = vld [vmem:[%s210 + $0x10] sm:$0xff]
      %v233 = vld [vmem:[%s210 + $0x18] sm:$0xff]
      %v234 = vpack.c.bf16 %v231, %v230
      %v235 = vpack.c.bf16 %v233, %v232
      %s236 = scalar_lea.vmem %s1, 32
      %v237 = vld [vmem:[%s236] sm:$0xf]
      %v238 = vld [vmem:[%s236 + $0x4] sm:$0xf]
      %v239 = vld [vmem:[%s236 + $0x8] sm:$0xf]
      %v240 = vld [vmem:[%s236 + $0xc] sm:$0xf]
      %v241 = vld [vmem:[%s236 + $0x10] sm:$0xf]
      %v242 = vld [vmem:[%s236 + $0x14] sm:$0xf]
      %v243 = vld [vmem:[%s236 + $0x18] sm:$0xf]
      %v244 = vld [vmem:[%s236 + $0x1c] sm:$0xf]
      %vm245 = vsmask.f32 256
      %v247 = vshrl.u32 %v234, 16
      %v249 = vrot.slane %v247, 7
      %v250 = vshll.u32 %v234, 16
      %v252 = vor.u32 %v249, %v250
      %v254 = vshrl.u32 %v235, 16
      %v256 = vrot.slane %v254, 7
      %v257 = vshll.u32 %v235, 16
      %v259 = vor.u32 %v256, %v257
      %v260 = vsel %vm245, %v249, %v259
      %vm262 = vcmask 1040384
      %vm263 = vmand %vm262, %vm245
      %v264 = vsel %vm263, 0, %v252
      %vm265 = vsmask.f32 7424
      %v266 = vrot.slane %v250, 1
      %v267 = vor.u32 %v247, %v266
      %v268 = vrot.slane %v257, 1
      %v269 = vsel %vm265, %v267, %v268
      %v270 = vor.u32 %v254, %v268
      %vm272 = vcmask 1047552
      %vm273 = vmand %vm272, %vm265
      %v274 = vsel %vm273, %v270, 0
      %v275 = vld [vmem:[%s1] sm:$0xf]
      %v276 = vld [vmem:[%s1 + $0x4] sm:$0xf]
      %v277 = vld [vmem:[%s1 + $0x8] sm:$0xf]
      %v278 = vld [vmem:[%s1 + $0xc] sm:$0xf]
      %v279 = vld [vmem:[%s1 + $0x10] sm:$0xf]
      %v280 = vld [vmem:[%s1 + $0x14] sm:$0xf]
      %v281 = vld [vmem:[%s1 + $0x18] sm:$0xf]
      %v282 = vld [vmem:[%s1 + $0x1c] sm:$0xf]
      %v291 = vunpack.c.l.b16 %v275
      %v292 = vunpack.c.l.b16 %v276
      %v293 = vunpack.c.l.b16 %v277
      %v294 = vunpack.c.l.b16 %v278
      %v295 = vunpack.c.l.b16 %v279
      %v296 = vunpack.c.l.b16 %v280
      %v297 = vunpack.c.l.b16 %v281
      %v298 = vunpack.c.l.b16 %v282
      %v299 = vpack.c.b16 %v292, %v291
      %v300 = vpack.c.b16 %v294, %v293
      %v301 = vpack.c.b16 %v296, %v295
      %v302 = vpack.c.b16 %v298, %v297
      %vm307 = vcmask 523264
      %v309 = vsel %vm307, %v264, 0
      %v312 = vsel %vm307, %v260, 0
      %314 = vmatprep.subr.bf16.mxu0 0
      %315 = vmatpush1.bf16.msra.mxu0 %v299
      %316 = vmatprep.subr.bf16.mxu0 0
      %317 = vmatpush1.bf16.msra.mxu0 %v300
      %318 = vmatprep.subr.bf16.mxu0 0
      %319 = vmatpush1.bf16.msra.mxu0 %v301
      %320 = vmatprep.subr.bf16.mxu0 0
      %321 = vmatpush1.bf16.msra.mxu0 %v302
      %322 = vmatprep.subr.bf16.mxu0 0
      %323 = vmatpush1.bf16.msra.mxu0 0
      %324 = vmatprep.subr.bf16.mxu0 0
      %325 = vmatpush1.bf16.msra.mxu0 0
      %326 = vmatprep.subr.bf16.mxu0 0
      %327 = vmatpush1.bf16.msra.mxu0 0
      %328 = vmatprep.subr.bf16.mxu0 0
      %329 = vmatpush1.bf16.msra.mxu0 0
      %330 = vmatprep.subr.bf16.mxu0 0
      %331 = vmatpush1.bf16.msra.mxu0 0
      %332 = vmatprep.subr.bf16.mxu0 0
      %333 = vmatpush1.bf16.msra.mxu0 0
      %334 = vmatprep.subr.bf16.mxu0 0
      %335 = vmatpush1.bf16.msra.mxu0 0
      %336 = vmatprep.subr.bf16.mxu0 0
      %337 = vmatpush1.bf16.msra.mxu0 0
      %338 = vmatprep.subr.bf16.mxu0 0
      %339 = vmatpush1.bf16.msra.mxu0 0
      %340 = vmatprep.subr.bf16.mxu0 0
      %341 = vmatpush1.bf16.msra.mxu0 0
      %342 = vmatprep.subr.bf16.mxu0 0
      %343 = vmatpush1.bf16.msra.mxu0 0
      %344 = vmatprep.subr.bf16.mxu0 0
      %345 = vmatpush1.bf16.msra.mxu0 0
      %346 = vmatprep.mubr.bf16.mxu0 0
      %347 = vmatmul.mubr.bf16.gmra.mrb[0].mxu0 %v309
      %v348 = vpop.f32.mrb[0].mxu0
      %v349 = vadd.f32 0.0, %v348
      %v350 = vpop.f32.mrb[0].mxu0
      %v351 = vpop.f32.mrb[0].mxu0
      %v352 = vadd.f32 0.0, %v351
      %v353 = vpop.f32.mrb[0].mxu0
      %354 = vmatprep.mubr.bf16.mxu0 0
      %355 = vmatmul.mubr.bf16.gmra.mrb[0].mxu0 %v312
      %v356 = vpop.f32.mrb[0].mxu0
      %v357 = vadd.f32 0.0, %v356
      %v358 = vpop.f32.mrb[0].mxu0
      %v359 = vpop.f32.mrb[0].mxu0
      %v360 = vadd.f32 0.0, %v359
      %v361 = vpop.f32.mrb[0].mxu0
      %362 = vdwg.mxu0
      %v371 = vunpack.c.l.b16 %v237
      %v372 = vunpack.c.l.b16 %v238
      %v373 = vunpack.c.l.b16 %v239
      %v374 = vunpack.c.l.b16 %v240
      %v375 = vunpack.c.l.b16 %v241
      %v376 = vunpack.c.l.b16 %v242
      %v377 = vunpack.c.l.b16 %v243
      %v378 = vunpack.c.l.b16 %v244
      %v379 = vpack.c.b16 %v372, %v371
      %v380 = vpack.c.b16 %v374, %v373
      %v381 = vpack.c.b16 %v376, %v375
      %v382 = vpack.c.b16 %v378, %v377
      %v387 = vsel %vm307, %v234, 0
      %v389 = vsel %vm307, %v235, 0
      %391 = vmatprep.subr.bf16.mxu0 0
      %392 = vmatpush1.bf16.msra.mxu0 %v379
      %393 = vmatprep.subr.bf16.mxu0 0
      %394 = vmatpush1.bf16.msra.mxu0 %v380
      %395 = vmatprep.subr.bf16.mxu0 0
      %396 = vmatpush1.bf16.msra.mxu0 %v381
      %397 = vmatprep.subr.bf16.mxu0 0
      %398 = vmatpush1.bf16.msra.mxu0 %v382
      %399 = vmatprep.subr.bf16.mxu0 0
      %400 = vmatpush1.bf16.msra.mxu0 0
      %401 = vmatprep.subr.bf16.mxu0 0
      %402 = vmatpush1.bf16.msra.mxu0 0
      %403 = vmatprep.subr.bf16.mxu0 0
      %404 = vmatpush1.bf16.msra.mxu0 0
      %405 = vmatprep.subr.bf16.mxu0 0
      %406 = vmatpush1.bf16.msra.mxu0 0
      %407 = vmatprep.subr.bf16.mxu0 0
      %408 = vmatpush1.bf16.msra.mxu0 0
      %409 = vmatprep.subr.bf16.mxu0 0
      %410 = vmatpush1.bf16.msra.mxu0 0
      %411 = vmatprep.subr.bf16.mxu0 0
      %412 = vmatpush1.bf16.msra.mxu0 0
      %413 = vmatprep.subr.bf16.mxu0 0
      %414 = vmatpush1.bf16.msra.mxu0 0
      %415 = vmatprep.subr.bf16.mxu0 0
      %416 = vmatpush1.bf16.msra.mxu0 0
      %417 = vmatprep.subr.bf16.mxu0 0
      %418 = vmatpush1.bf16.msra.mxu0 0
      %419 = vmatprep.subr.bf16.mxu0 0
      %420 = vmatpush1.bf16.msra.mxu0 0
      %421 = vmatprep.subr.bf16.mxu0 0
      %422 = vmatpush1.bf16.msra.mxu0 0
      %423 = vmatprep.mubr.bf16.mxu0 0
      %424 = vmatmul.mubr.bf16.gmra.mrb[0].mxu0 %v387
      %v425 = vpop.f32.mrb[0].mxu0
      %v426 = vadd.f32 %v349, %v425
      %v427 = vpop.f32.mrb[0].mxu0
      %v428 = vpop.f32.mrb[0].mxu0
      %v429 = vadd.f32 %v352, %v428
      %v430 = vpop.f32.mrb[0].mxu0
      %431 = vmatprep.mubr.bf16.mxu0 0
      %432 = vmatmul.mubr.bf16.gmra.mrb[0].mxu0 %v389
      %v433 = vpop.f32.mrb[0].mxu0
      %v434 = vadd.f32 %v357, %v433
      %v435 = vpop.f32.mrb[0].mxu0
      %v436 = vpop.f32.mrb[0].mxu0
      %v437 = vadd.f32 %v360, %v436
      %v438 = vpop.f32.mrb[0].mxu0
      %439 = vdwg.mxu0
      %s440 = scalar_lea.vmem %s1, 64
      %v441 = vld [vmem:[%s440] sm:$0xf]
      %v442 = vld [vmem:[%s440 + $0x4] sm:$0xf]
      %v443 = vld [vmem:[%s440 + $0x8] sm:$0xf]
      %v444 = vld [vmem:[%s440 + $0xc] sm:$0xf]
      %v445 = vld [vmem:[%s440 + $0x10] sm:$0xf]
      %v446 = vld [vmem:[%s440 + $0x14] sm:$0xf]
      %v447 = vld [vmem:[%s440 + $0x18] sm:$0xf]
      %v448 = vld [vmem:[%s440 + $0x1c] sm:$0xf]
      %v457 = vunpack.c.l.b16 %v441
      %v458 = vunpack.c.l.b16 %v442
      %v459 = vunpack.c.l.b16 %v443
      %v460 = vunpack.c.l.b16 %v444
      %v461 = vunpack.c.l.b16 %v445
      %v462 = vunpack.c.l.b16 %v446
      %v463 = vunpack.c.l.b16 %v447
      %v464 = vunpack.c.l.b16 %v448
      %v465 = vpack.c.b16 %v458, %v457
      %v466 = vpack.c.b16 %v460, %v459
      %v467 = vpack.c.b16 %v462, %v461
      %v468 = vpack.c.b16 %v464, %v463
      %v474 = vsel %vm307, %v269, 0
      %v477 = vsel %vm307, %v274, 0
      %479 = vmatprep.subr.bf16.mxu0 0
      %480 = vmatpush1.bf16.msra.mxu0 %v465
      %481 = vmatprep.subr.bf16.mxu0 0
      %482 = vmatpush1.bf16.msra.mxu0 %v466
      %483 = vmatprep.subr.bf16.mxu0 0
      %484 = vmatpush1.bf16.msra.mxu0 %v467
      %485 = vmatprep.subr.bf16.mxu0 0
      %486 = vmatpush1.bf16.msra.mxu0 %v468
      %487 = vmatprep.subr.bf16.mxu0 0
      %488 = vmatpush1.bf16.msra.mxu0 0
      %489 = vmatprep.subr.bf16.mxu0 0
      %490 = vmatpush1.bf16.msra.mxu0 0
      %491 = vmatprep.subr.bf16.mxu0 0
      %492 = vmatpush1.bf16.msra.mxu0 0
      %493 = vmatprep.subr.bf16.mxu0 0
      %494 = vmatpush1.bf16.msra.mxu0 0
      %495 = vmatprep.subr.bf16.mxu0 0
      %496 = vmatpush1.bf16.msra.mxu0 0
      %497 = vmatprep.subr.bf16.mxu0 0
      %498 = vmatpush1.bf16.msra.mxu0 0
      %499 = vmatprep.subr.bf16.mxu0 0
      %500 = vmatpush1.bf16.msra.mxu0 0
      %501 = vmatprep.subr.bf16.mxu0 0
      %502 = vmatpush1.bf16.msra.mxu0 0
      %503 = vmatprep.subr.bf16.mxu0 0
      %504 = vmatpush1.bf16.msra.mxu0 0
      %505 = vmatprep.subr.bf16.mxu0 0
      %506 = vmatpush1.bf16.msra.mxu0 0
      %507 = vmatprep.subr.bf16.mxu0 0
      %508 = vmatpush1.bf16.msra.mxu0 0
      %509 = vmatprep.subr.bf16.mxu0 0
      %510 = vmatpush1.bf16.msra.mxu0 0
      %511 = vmatprep.mubr.bf16.mxu0 0
      %512 = vmatmul.mubr.bf16.gmra.mrb[0].mxu0 %v474
      %v513 = vpop.f32.mrb[0].mxu0
      %v514 = vadd.f32 0.0, %v513
      %v515 = vpop.f32.mrb[0].mxu0
      %v516 = vpop.f32.mrb[0].mxu0
      %v517 = vadd.f32 0.0, %v516
      %v518 = vpop.f32.mrb[0].mxu0
      %519 = vmatprep.mubr.bf16.mxu0 0
      %520 = vmatmul.mubr.bf16.gmra.mrb[0].mxu0 %v477
      %v521 = vpop.f32.mrb[0].mxu0
      %v522 = vadd.f32 0.0, %v521
      %v523 = vpop.f32.mrb[0].mxu0
      %v524 = vpop.f32.mrb[0].mxu0
      %v525 = vadd.f32 0.0, %v524
      %v526 = vpop.f32.mrb[0].mxu0
      %527 = vdwg.mxu0
      %v528 = vadd.f32 %v426, %v514
      %v529 = vadd.f32 %v429, %v517
      %v530 = vadd.f32 %v434, %v522
      %v531 = vadd.f32 %v437, %v525
      %v532 = vpack.c.bf16 %v529, %v528
      %v533 = vpack.c.bf16 %v531, %v530
      %v536 = vunpack.c.l.b16 %v532
      %v537 = vunpack.c.h.b16 %v532
      %v538 = vunpack.c.l.b16 %v533
      %v539 = vunpack.c.h.b16 %v533
      %v540 = vpack.c.b16 %v536, %v536
      %v541 = vpack.c.b16 %v537, %v537
      %v542 = vpack.c.b16 %v538, %v538
      %v543 = vpack.c.b16 %v539, %v539
      %548 = vst [vmem:[%s220] sm:$0xf] %v540
      %549 = vst [vmem:[%s220 + $0x4] sm:$0xf] %v541
      %550 = vst [vmem:[%s220 + $0x8] sm:$0xf] %v542
      %551 = vst [vmem:[%s220 + $0xc] sm:$0xf] %v543
      %v552 = vadd.f32 %v528, %v529
      %v553 = vadd.f32 %v552, %v530
      %v554 = vadd.f32 %v553, %v531
      %v555 = vrot.slane %v554, 4
      %v556 = vadd.f32 %v554, %v555
      %v557 = vrot.slane %v556, 2
      %v558 = vadd.f32 %v556, %v557
      %v559 = vrot.slane %v558, 1
      %v560 = vadd.f32 %v558, %v559
      %v561 = vmul.f32 %v528, %v528
      %v562 = vmul.f32 %v529, %v529
      %v563 = vmul.f32 %v530, %v530
      %v564 = vmul.f32 %v531, %v531
      %v565 = vadd.f32 %v561, %v562
      %v566 = vadd.f32 %v565, %v563
      %v567 = vadd.f32 %v566, %v564
      %v568 = vrot.slane %v567, 4
      %v569 = vadd.f32 %v567, %v568
      %v570 = vrot.slane %v569, 2
      %v571 = vadd.f32 %v569, %v570
      %v572 = vrot.slane %v571, 1
      %v573 = vadd.f32 %v571, %v572
      %vm574 = vcmask 1040384
      %v575 = vsel %vm574, %v560, %v573
      %vm576 = vcmask 1041408
      %v577 = vsel %vm576, %v575, 0.0
      %578 = vst [vmem:[%s228] sm:$0xff] %v577
      %s579 = smul.u32 4, %s20
      %p580 = scmp.lt.s32.totalorder %s19, 1
      %s581 = scalar_select %p580, %s19, 1
      %p582 = scmp.lt.s32.totalorder %s579, 3
      %s583 = scalar_select %p582, %s579, 3
      %s584 = smul.addr %s581, 4
      %s585 = sadd.s32 %s583, %s584
      %s586 = smul.addr %s585, 4
      %s587 = scalar_lea.vmem %s2, %s586
      %p588 = scmp.lt.s32.totalorder %s19, 1
      %s589 = scalar_select %p588, %s19, 1
      %p590 = scmp.lt.s32.totalorder %s20, 0
      %s591 = scalar_select %p590, %s20, 0
      %s592 = sadd.s32 %s591, %s589
      %s593 = smul.addr %s592, 8
      %s594 = scalar_lea.vmem %s3, %s593
      // Predicated region
      $region29: #{double_conv.2} parent=27 // pred_check
        %p595 = pneg %p96
      $region30: #{double_conv.2} parent=27 // pred_check_branch
        %597 = sbr.rel (%p595) target = $region32
      $region31: #{double_conv.2} parent=27 // pred_region
        %s598 = smul.u32 4, %s20
      $region32: #{double_conv.2} parent=27 // pred_fallthru
        _
      // Predicated region
      $region33: #{double_conv.2} parent=27 // pred_check
        %p599 = pneg %p124
      $region34: #{double_conv.2} parent=27 // pred_check_branch
        %601 = sbr.rel (%p599) target = $region36
      $region35: #{double_conv.2} parent=27 // pred_region
        _
      $region36: #{double_conv.2} parent=27 // pred_fallthru
        _
    $region28: #{double_conv.2} parent=5 // pred_fallthru
      _
    %p602 = scmp.le.s32.totalorder 2, %s10
    // Predicated region
    $region37: #{double_conv.2} parent=5 // pred_check
      %p603 = pneg %p602
    $region38: #{double_conv.2} parent=5 // pred_check_branch
      %605 = sbr.rel (%p603) target = $region40
    $region39: #{double_conv.2} parent=5 // pred_region
      %s606 = ssub.s32 %s10, 2
      // Predicated region
      $region41: #{double_conv.2} parent=39 // pred_check
        %p607 = pneg %p102
      $region42: #{double_conv.2} parent=39 // pred_check_branch
        %609 = sbr.rel (%p607) target = $region44
      $region43: #{double_conv.2} parent=39 // pred_region
        %s610 = smul.u32 4, %s22
        %p611 = scmp.lt.s32.totalorder %s21, 1
        %s612 = scalar_select %p611, %s21, 1
        %p613 = scmp.lt.s32.totalorder %s610, 3
        %s614 = scalar_select %p613, %s610, 3
        %s615 = smul.addr %s612, 4
        %s616 = sadd.s32 %s614, %s615
        %s617 = smul.addr %s616, 4
        %s618 = scalar_lea.vmem %s2, %s617
      $region44: #{double_conv.2} parent=39 // pred_fallthru
        _
      // Predicated region
      $region45: #{double_conv.2} parent=39 // pred_check
        %p619 = pneg %p130
      $region46: #{double_conv.2} parent=39 // pred_check_branch
        %621 = sbr.rel (%p619) target = $region48
      $region47: #{double_conv.2} parent=39 // pred_region
        %p622 = scmp.lt.s32.totalorder %s21, 1
        %s623 = scalar_select %p622, %s21, 1
        %p624 = scmp.lt.s32.totalorder %s22, 0
        %s625 = scalar_select %p624, %s22, 0
        %s626 = sadd.s32 %s625, %s623
        %s627 = smul.addr %s626, 8
        %s628 = scalar_lea.vmem %s3, %s627
      $region48: #{double_conv.2} parent=39 // pred_fallthru
        _
    $region40: #{double_conv.2} parent=5 // pred_fallthru
      _
  $region6: #{double_conv.2} parent=0 // loop_footer
    %s14 = sadd.s32 1, %s10
  $region7: #{double_conv.2} parent=0 // loop_footer_branch
    %9 = sbr.rel target = $region3
  $region8: #{double_conv.2} parent=0 // loop_exit
    _

// kernel: tile.13
$region0: #{tile.13}
  #allocation0 [shape = 's32[1]{0}', space=sflag, size = 0x4, scoped, tag = 'scoped memory for tile.13']
  %s0 = inlined_call_operand.vmem [shape: f32[8], index: 0, kind: input, shape index: {}]
  %s1 = inlined_call_operand.vmem [shape: f32[16,8], index: 1, kind: output, shape index: {}]
  // Predicated region
  $region2: #{tile.13} parent=0 // pred_check
    _
  $region3: #{tile.13} parent=0 // pred_check_branch
    %3 = sbr.rel (0) target = $region5
  $region4: #{tile.13} parent=0 // pred_region
    _
  $region5: #{tile.13} parent=0 // pred_fallthru
    _
  %v4 = vld [vmem:[%s0] ss:$0 sm:$0xff]
  %5 = vst [vmem:[%s1] sm:$0xff] %v4
  %s6 = scalar_lea.vmem %s1, 8
  %7 = vst [vmem:[%s6] sm:$0xff] %v4

// kernel: tile.14
$region0: #{tile.14}
  %s0 = inlined_call_operand.vmem [shape: f32[16,8], index: 0, kind: input, shape index: {}]
  %s1 = inlined_call_operand.vmem [shape: f32[1,128], index: 1, kind: output, shape index: {}]
  $region1: #{tile.14} parent=0
    #allocation0 [shape = 'u8[4096]{0}', space=vmem, size = 0x1000, scoped, tag = 'scoped mem for output reshape']
    %v2 = vld [vmem:[%s0] sm:$0x1]
    %vm3 = vcmask 64512
    %4 = vst.msk [vmem:[#allocation0] sm:$0x1] %vm3, %v2
    %s5 = scalar_lea.vmem %s0, 15
    %v6 = vld [vmem:[%s5] sm:$0x1]
    %7 = vrot.lane.b32.xlu0 %v6, 120
    %v8 = vpop.permute.xlu0 %7
    %vm9 = vcmask 1048512
    %10 = vst.msk [vmem:[#allocation0] sm:$0x1] %vm9, %v8
    %s11 = scalar_lea.vmem %s0, 14
    %v12 = vld [vmem:[%s11] sm:$0x1]
    %13 = vrot.lane.b32.xlu0 %v12, 112
    %v14 = vpop.permute.xlu0 %13
    %vm15 = vcmask 982912
    %16 = vst.msk [vmem:[#allocation0] sm:$0x1] %vm15, %v14
    %s17 = scalar_lea.vmem %s0, 13
    %v18 = vld [vmem:[%s17] sm:$0x1]
    %19 = vrot.lane.b32.xlu0 %v18, 104
    %v20 = vpop.permute.xlu0 %19
    %vm21 = vcmask 917312
    %22 = vst.msk [vmem:[#allocation0] sm:$0x1] %vm21, %v20
    %s23 = scalar_lea.vmem %s0, 12
    %v24 = vld [vmem:[%s23] sm:$0x1]
    %25 = vrot.lane.b32.xlu0 %v24, 96
    %v26 = vpop.permute.xlu0 %25
    %vm27 = vcmask 851712
    %28 = vst.msk [vmem:[#allocation0] sm:$0x1] %vm27, %v26
    %s29 = scalar_lea.vmem %s0, 11
    %v30 = vld [vmem:[%s29] sm:$0x1]
    %31 = vrot.lane.b32.xlu0 %v30, 88
    %v32 = vpop.permute.xlu0 %31
    %vm33 = vcmask 786112
    %34 = vst.msk [vmem:[#allocation0] sm:$0x1] %vm33, %v32
    %s35 = scalar_lea.vmem %s0, 10
    %v36 = vld [vmem:[%s35] sm:$0x1]
    %37 = vrot.lane.b32.xlu0 %v36, 80
    %v38 = vpop.permute.xlu0 %37
    %vm39 = vcmask 720512
    %40 = vst.msk [vmem:[#allocation0] sm:$0x1] %vm39, %v38
    %s41 = scalar_lea.vmem %s0, 9
    %v42 = vld [vmem:[%s41] sm:$0x1]
    %43 = vrot.lane.b32.xlu0 %v42, 72
    %v44 = vpop.permute.xlu0 %43
    %vm45 = vcmask 654912
    %46 = vst.msk [vmem:[#allocation0] sm:$0x1] %vm45, %v44
    %s47 = scalar_lea.vmem %s0, 8
    %v48 = vld [vmem:[%s47] sm:$0x1]
    %49 = vrot.lane.b32.xlu0 %v48, 64
    %v50 = vpop.permute.xlu0 %49
    %vm51 = vcmask 589312
    %52 = vst.msk [vmem:[#allocation0] sm:$0x1] %vm51, %v50
    %s53 = scalar_lea.vmem %s0, 7
    %v54 = vld [vmem:[%s53] sm:$0x1]
    %55 = vrot.lane.b32.xlu0 %v54, 56
    %v56 = vpop.permute.xlu0 %55
    %vm57 = vcmask 523712
    %58 = vst.msk [vmem:[#allocation0] sm:$0x1] %vm57, %v56
    %s59 = scalar_lea.vmem %s0, 6
    %v60 = vld [vmem:[%s59] sm:$0x1]
    %61 = vrot.lane.b32.xlu0 %v60, 48
    %v62 = vpop.permute.xlu0 %61
    %vm63 = vcmask 458112
    %64 = vst.msk [vmem:[#allocation0] sm:$0x1] %vm63, %v62
    %s65 = scalar_lea.vmem %s0, 5
    %v66 = vld [vmem:[%s65] sm:$0x1]
    %67 = vrot.lane.b32.xlu0 %v66, 40
    %v68 = vpop.permute.xlu0 %67
    %vm69 = vcmask 392512
    %70 = vst.msk [vmem:[#allocation0] sm:$0x1] %vm69, %v68
    %s71 = scalar_lea.vmem %s0, 4
    %v72 = vld [vmem:[%s71] sm:$0x1]
    %73 = vrot.lane.b32.xlu0 %v72, 32
    %v74 = vpop.permute.xlu0 %73
    %vm75 = vcmask 326912
    %76 = vst.msk [vmem:[#allocation0] sm:$0x1] %vm75, %v74
    %s77 = scalar_lea.vmem %s0, 3
    %v78 = vld [vmem:[%s77] sm:$0x1]
    %79 = vrot.lane.b32.xlu0 %v78, 24
    %v80 = vpop.permute.xlu0 %79
    %vm81 = vcmask 261312
    %82 = vst.msk [vmem:[#allocation0] sm:$0x1] %vm81, %v80
    %s83 = scalar_lea.vmem %s0, 2
    %v84 = vld [vmem:[%s83] sm:$0x1]
    %85 = vrot.lane.b32.xlu0 %v84, 16
    %v86 = vpop.permute.xlu0 %85
    %vm87 = vcmask 195712
    %88 = vst.msk [vmem:[#allocation0] sm:$0x1] %vm87, %v86
    %s89 = scalar_lea.vmem %s0, 1
    %v90 = vld [vmem:[%s89] sm:$0x1]
    %91 = vrot.lane.b32.xlu0 %v90, 8
    %v92 = vpop.permute.xlu0 %91
    %vm93 = vcmask 130112
    %94 = vst.msk [vmem:[#allocation0] sm:$0x1] %vm93, %v92
    %s96 = sshllo.u32 0, 1
    %v98 = vld [vmem:[#allocation0] sm:%s96]
    %s99 = sshllo.u32 0, 1
    %100 = vst [vmem:[%s1] sm:%s99] %v98

// kernel: double_conv.3
$region0: #{double_conv.3}
  #allocation0 [shape = 'u32[]', space=smem, size = 0x4, offset = 0x4, fixed_abs, tag = 'smem constant byte address 0x4 - core index']
  #allocation1 [shape = 'u32[144,128]{1,0:T(1,128)}', space=vmem, size = 0x12000, scoped, tag = 'internal scratch']
  %s0 = inlined_call_operand.vmem [shape: bf16[2,32,128], index: 0, kind: input, shape index: {}]
  %s1 = inlined_call_operand.vmem [shape: f32[1,128], index: 1, kind: input, shape index: {}]
  %s2 = inlined_call_operand.vmem [shape: f32[1,128], index: 2, kind: input, shape index: {}]
  %s3 = inlined_call_operand.vmem [shape: bf16[3,128,128], index: 3, kind: input, shape index: {}]
  %s4 = inlined_call_operand.vmem [shape: f32[2,32,128], index: 4, kind: output, shape index: {0}]
  %s5 = inlined_call_operand.vmem [shape: f32[2,1,8,128], index: 5, kind: output, shape index: {1}]
  %6 = xla_tuple %s4, %s5
  %s7 = sld [smem:[#allocation0]]
  $region57: #{double_conv.3} parent=0
    _
  %s9 = ssub.s32 1, %s7
  %s10 = scalar_select 0, %s9, %s7
  loop: start=0, step=1, limit=4
  $region2: #{double_conv.3} parent=0 // loop_pre_header
    _
  $region3: #{double_conv.3} parent=0 // loop_header
    %s12 = sphi 0, %s16
    %p13 = scmp.ge.s32.totalorder %s12, 4
    %s19 = sphi 0, %s31
    %s20 = sphi 0, %s27
    %s21 = sphi 0, %s19
    %s22 = sphi 0, %s20
    %s23 = sphi 0, %s21
    %s24 = sphi 0, %s22
    %s36 = sphi 0, %s38
    %s39 = sphi 0, %s36
    %s40 = sphi 0, %s39
    %s56 = sphi 0, %s40
    %s60 = sphi 0, %s60
    %s62 = sphi 0, %s60
    %s63 = sphi 0, %s62
    %s77 = sphi 0, %s63
    %s81 = sphi 0, %s81
    %s83 = sphi 0, %s81
    %s84 = sphi 0, %s83
    %s98 = sphi 0, %s84
    %s102 = sphi 0, %s102
    %s104 = sphi 0, %s102
    %s105 = sphi 0, %s104
    %s119 = sphi 0, %s105
    %s127 = sphi 0, %s129
    %s130 = sphi 0, %s127
    %s131 = sphi 0, %s130
    %s147 = sphi 0, %s131
    %s155 = sphi 0, %s157
    %s158 = sphi 0, %s155
    %s159 = sphi 0, %s158
    %s175 = sphi 0, %s159
  $region4: #{double_conv.3} parent=0 // loop_header_branch
    %15 = sbr.rel (%p13) target = $region8
  $region5: #{double_conv.3} parent=0 // loop_body
    %s17 = ssub.s32 %s12, 1
    %s18 = ssub.s32 %s12, 2
    %s25 = sadd.s32 1, %s20
    %p26 = scmp.ge.s32.totalorder %s25, 1
    %s27 = scalar_select %p26, 0, %s25
    %s28 = sadd.s32 1, %s19
    %s29 = scalar_select %p26, %s28, %s19
    %p30 = scmp.ge.s32.totalorder %s29, 2
    %s31 = scalar_select %p30, 0, %s29
    %s32 = ssub.s32 %s19, %s31
    %s33 = ssub.s32 %s20, %s27
    %s34 = sor.u32 %s32, %s33
    %p35 = scmp.eq.s32.totalorder %s34, 0
    %s37 = sadd.s32 %s36, 1
    %s38 = scalar_select %p35, %s36, %s37
    %p41 = pneg %p35
    %p42 = scmp.eq.s32.totalorder %s12, 1
    %p43 = por %p41, %p42
    %p44 = scmp.ne.s32.totalorder %s36, %s39
    %p45 = scmp.eq.s32.totalorder %s12, 0
    %p46 = por %p44, %p45
    %p47 = scmp.ne.s32.totalorder %s36, %s39
    %p48 = scmp.eq.s32.totalorder %s17, 1
    %p49 = por %p47, %p48
    %p50 = scmp.ne.s32.totalorder %s39, %s40
    %p51 = scmp.eq.s32.totalorder %s17, 0
    %p52 = por %p50, %p51
    %p53 = scmp.ne.s32.totalorder %s39, %s40
    %p54 = scmp.eq.s32.totalorder %s18, 1
    %p55 = por %p53, %p54
    %p57 = scmp.ne.s32.totalorder %s40, %s56
    %p58 = scmp.eq.s32.totalorder %s18, 0
    %p59 = por %p57, %p58
    %s61 = sadd.s32 %s60, 1
    %p64 = scmp.eq.s32.totalorder %s12, 1
    %p65 = scmp.ne.s32.totalorder %s60, %s62
    %p66 = scmp.eq.s32.totalorder %s12, 0
    %p67 = por %p65, %p66
    %p68 = scmp.ne.s32.totalorder %s60, %s62
    %p69 = scmp.eq.s32.totalorder %s17, 1
    %p70 = por %p68, %p69
    %p71 = scmp.ne.s32.totalorder %s62, %s63
    %p72 = scmp.eq.s32.totalorder %s17, 0
    %p73 = por %p71, %p72
    %p74 = scmp.ne.s32.totalorder %s62, %s63
    %p75 = scmp.eq.s32.totalorder %s18, 1
    %p76 = por %p74, %p75
    %p78 = scmp.ne.s32.totalorder %s63, %s77
    %p79 = scmp.eq.s32.totalorder %s18, 0
    %p80 = por %p78, %p79
    %s82 = sadd.s32 %s81, 1
    %p85 = scmp.eq.s32.totalorder %s12, 1
    %p86 = scmp.ne.s32.totalorder %s81, %s83
    %p87 = scmp.eq.s32.totalorder %s12, 0
    %p88 = por %p86, %p87
    %p89 = scmp.ne.s32.totalorder %s81, %s83
    %p90 = scmp.eq.s32.totalorder %s17, 1
    %p91 = por %p89, %p90
    %p92 = scmp.ne.s32.totalorder %s83, %s84
    %p93 = scmp.eq.s32.totalorder %s17, 0
    %p94 = por %p92, %p93
    %p95 = scmp.ne.s32.totalorder %s83, %s84
    %p96 = scmp.eq.s32.totalorder %s18, 1
    %p97 = por %p95, %p96
    %p99 = scmp.ne.s32.totalorder %s84, %s98
    %p100 = scmp.eq.s32.totalorder %s18, 0
    %p101 = por %p99, %p100
    %s103 = sadd.s32 %s102, 1
    %p106 = scmp.eq.s32.totalorder %s12, 1
    %p107 = scmp.ne.s32.totalorder %s102, %s104
    %p108 = scmp.eq.s32.totalorder %s12, 0
    %p109 = por %p107, %p108
    %p110 = scmp.ne.s32.totalorder %s102, %s104
    %p111 = scmp.eq.s32.totalorder %s17, 1
    %p112 = por %p110, %p111
    %p113 = scmp.ne.s32.totalorder %s104, %s105
    %p114 = scmp.eq.s32.totalorder %s17, 0
    %p115 = por %p113, %p114
    %p116 = scmp.ne.s32.totalorder %s104, %s105
    %p117 = scmp.eq.s32.totalorder %s18, 1
    %p118 = por %p116, %p117
    %p120 = scmp.ne.s32.totalorder %s105, %s119
    %p121 = scmp.eq.s32.totalorder %s18, 0
    %p122 = por %p120, %p121
    %s123 = ssub.s32 %s19, %s31
    %s124 = ssub.s32 %s20, %s27
    %s125 = sor.u32 %s123, %s124
    %p126 = scmp.eq.s32.totalorder %s125, 0
    %s128 = sadd.s32 %s127, 1
    %s129 = scalar_select %p126, %s127, %s128
    %p132 = pneg %p126
    %p133 = scmp.eq.s32.totalorder %s12, 1
    %p134 = por %p132, %p133
    %p135 = scmp.ne.s32.totalorder %s127, %s130
    %p136 = scmp.eq.s32.totalorder %s12, 0
    %p137 = por %p135, %p136
    %p138 = scmp.ne.s32.totalorder %s127, %s130
    %p139 = scmp.eq.s32.totalorder %s17, 1
    %p140 = por %p138, %p139
    %p141 = scmp.ne.s32.totalorder %s130, %s131
    %p142 = scmp.eq.s32.totalorder %s17, 0
    %p143 = por %p141, %p142
    %p144 = scmp.ne.s32.totalorder %s130, %s131
    %p145 = scmp.eq.s32.totalorder %s18, 1
    %p146 = por %p144, %p145
    %p148 = scmp.ne.s32.totalorder %s131, %s147
    %p149 = scmp.eq.s32.totalorder %s18, 0
    %p150 = por %p148, %p149
    %s151 = ssub.s32 %s19, %s31
    %s152 = ssub.s32 %s20, %s27
    %s153 = sor.u32 %s151, %s152
    %p154 = scmp.eq.s32.totalorder %s153, 0
    %s156 = sadd.s32 %s155, 1
    %s157 = scalar_select %p154, %s155, %s156
    %p160 = pneg %p154
    %p161 = scmp.eq.s32.totalorder %s12, 1
    %p162 = por %p160, %p161
    %p163 = scmp.ne.s32.totalorder %s155, %s158
    %p164 = scmp.eq.s32.totalorder %s12, 0
    %p165 = por %p163, %p164
    %p166 = scmp.ne.s32.totalorder %s155, %s158
    %p167 = scmp.eq.s32.totalorder %s17, 1
    %p168 = por %p166, %p167
    %p169 = scmp.ne.s32.totalorder %s158, %s159
    %p170 = scmp.eq.s32.totalorder %s17, 0
    %p171 = por %p169, %p170
    %p172 = scmp.ne.s32.totalorder %s158, %s159
    %p173 = scmp.eq.s32.totalorder %s18, 1
    %p174 = por %p172, %p173
    %p176 = scmp.ne.s32.totalorder %s159, %s175
    %p177 = scmp.eq.s32.totalorder %s18, 0
    %p178 = por %p176, %p177
    %p179 = scmp.le.s32.totalorder 1, %s12
    %p180 = scmp.lt.s32.totalorder %s12, 3
    %p181 = pnand %p179, %p180
    %p182 = pneg %p181
    // Predicated region
    $region9: #{double_conv.3} parent=5 // pred_check
      _
    $region10: #{double_conv.3} parent=5 // pred_check_branch
      %184 = sbr.rel (%p181) target = $region12
    $region11: #{double_conv.3} parent=5 // pred_region
      %s185 = ssub.s32 %s12, 1
      // Predicated region
      $region13: #{double_conv.3} parent=11 // pred_check
        %p186 = pneg %p73
      $region14: #{double_conv.3} parent=11 // pred_check_branch
        %188 = sbr.rel (%p186) target = $region16
      $region15: #{double_conv.3} parent=11 // pred_region
        _
      $region16: #{double_conv.3} parent=11 // pred_fallthru
        _
      // Predicated region
      $region17: #{double_conv.3} parent=11 // pred_check
        %p189 = pneg %p94
      $region18: #{double_conv.3} parent=11 // pred_check_branch
        %191 = sbr.rel (%p189) target = $region20
      $region19: #{double_conv.3} parent=11 // pred_region
        _
      $region20: #{double_conv.3} parent=11 // pred_fallthru
        _
      // Predicated region
      $region21: #{double_conv.3} parent=11 // pred_check
        %p192 = pneg %p115
      $region22: #{double_conv.3} parent=11 // pred_check_branch
        %194 = sbr.rel (%p192) target = $region24
      $region23: #{double_conv.3} parent=11 // pred_region
        _
      $region24: #{double_conv.3} parent=11 // pred_fallthru
        _
    $region12: #{double_conv.3} parent=5 // pred_fallthru
      _
    %p195 = scmp.lt.s32.totalorder %s12, 2
    // Predicated region
    $region25: #{double_conv.3} parent=5 // pred_check
      %p196 = pneg %p195
    $region26: #{double_conv.3} parent=5 // pred_check_branch
      %198 = sbr.rel (%p196) target = $region28
    $region27: #{double_conv.3} parent=5 // pred_region
      // Predicated region
      $region29: #{double_conv.3} parent=27 // pred_check
        %p199 = pneg %p46
      $region30: #{double_conv.3} parent=27 // pred_check_branch
        %201 = sbr.rel (%p199) target = $region32
      $region31: #{double_conv.3} parent=27 // pred_region
        %s202 = smul.u32 4, %s20
        %p203 = scmp.lt.s32.totalorder %s19, 1
        %s204 = scalar_select %p203, %s19, 1
        %p205 = scmp.lt.s32.totalorder %s202, 3
        %s206 = scalar_select %p205, %s202, 3
        %s207 = smul.addr %s204, 4
        %s208 = sadd.s32 %s206, %s207
        %s209 = smul.addr %s208, 4
        %s210 = scalar_lea.vmem %s0, %s209
        %s211 = smul.u32 4, %s20
      $region32: #{double_conv.3} parent=27 // pred_fallthru
        _
    $region28: #{double_conv.3} parent=5 // pred_fallthru
      _
    %p212 = scmp.le.s32.totalorder 1, %s12
    %p213 = scmp.lt.s32.totalorder %s12, 3
    %p214 = pnand %p212, %p213
    %p215 = pneg %p214
    // Predicated region
    $region33: #{double_conv.3} parent=5 // pred_check
      _
    $region34: #{double_conv.3} parent=5 // pred_check_branch
      %217 = sbr.rel (%p214) target = $region36
    $region35: #{double_conv.3} parent=5 // pred_region
      %s218 = ssub.s32 %s12, 1
      %s219 = smul.u32 4, %s22
      %p220 = scmp.lt.s32.totalorder %s21, 1
      %s221 = scalar_select %p220, %s21, 1
      %p222 = scmp.lt.s32.totalorder %s219, 3
      %s223 = scalar_select %p222, %s219, 3
      %s224 = smul.addr %s221, 4
      %s225 = sadd.s32 %s223, %s224
      %s226 = smul.addr %s225, 4
      %s227 = scalar_lea.vmem %s0, %s226
      %p228 = pneg %p52
      %p229 = pneg %p49
      %p230 = pneg %p73
      %p231 = pneg %p70
      %p232 = pneg %p94
      %p233 = pneg %p91
      %p234 = pneg %p115
      %p235 = pneg %p112
      %p236 = pneg %p143
      %p237 = pneg %p140
      %s238 = smul.u32 4, %s22
      %p239 = scmp.lt.s32.totalorder %s21, 1
      %s240 = scalar_select %p239, %s21, 1
      %p241 = scmp.lt.s32.totalorder %s238, 3
      %s242 = scalar_select %p241, %s238, 3
      %s243 = smul.addr %s240, 4
      %s244 = sadd.s32 %s242, %s243
      %s245 = smul.addr %s244, 8
      %s246 = scalar_lea.vmem %s4, %s245
      %p247 = pneg %p171
      %p248 = pneg %p168
      %p249 = scmp.lt.s32.totalorder %s21, 1
      %s250 = scalar_select %p249, %s21, 1
      %p251 = scmp.lt.s32.totalorder %s22, 0
      %s252 = scalar_select %p251, %s22, 0
      %s253 = sadd.s32 %s252, %s250
      %s254 = smul.addr %s253, 8
      %s255 = scalar_lea.vmem %s5, %s254
      %s256 = smul.u32 4, %s22
      %p257 = scmp.lt.s32.totalorder %s21, 1
      %s258 = scalar_select %p257, %s21, 1
      %p259 = scmp.lt.s32.totalorder %s256, 3
      %s260 = scalar_select %p259, %s256, 3
      %s261 = smul.addr %s258, 4
      %s262 = sadd.s32 %s260, %s261
      %s263 = smul.addr %s262, 4
      %s264 = scalar_lea.vmem %s0, %s263
      %s265 = smul.u32 4, %s22
      %s266 = smul.u32 4, %s22
      %p267 = scmp.lt.s32.totalorder %s21, 1
      %s268 = scalar_select %p267, %s21, 1
      %p269 = scmp.lt.s32.totalorder %s266, 3
      %s270 = scalar_select %p269, %s266, 3
      %s271 = smul.addr %s268, 4
      %s272 = sadd.s32 %s270, %s271
      %s273 = smul.addr %s272, 8
      %s274 = scalar_lea.vmem %s4, %s273
      %s275 = smul.u32 4, %s22
      %p276 = scmp.lt.s32.totalorder %s21, 1
      %s277 = scalar_select %p276, %s21, 1
      %p278 = scmp.lt.s32.totalorder %s22, 0
      %s279 = scalar_select %p278, %s22, 0
      %s280 = sadd.s32 %s279, %s277
      %s281 = smul.addr %s280, 8
      %s282 = scalar_lea.vmem %s5, %s281
      %v284 = vld [vmem:[%s1] sm:$0x1]
      %v285 = vld [vmem:[%s2] sm:$0x1]
      %v286 = vld [vmem:[%s264] sm:$0xf]
      %v287 = vld [vmem:[%s264 + $0x4] sm:$0xf]
      %v288 = vld [vmem:[%s264 + $0x8] sm:$0xf]
      %v289 = vld [vmem:[%s264 + $0xc] sm:$0xf]
      %v290 = vunpack.c.l.bf16 %v286
      %v291 = vunpack.c.l.bf16 %v287
      %v292 = vunpack.c.l.bf16 %v288
      %v293 = vunpack.c.l.bf16 %v289
      %v295 = vlaneseq
      %v296 = vshrl.u32 %v295, 7
      %v297 = vsub.s32 0, %v296
      %v298 = vrot.slane %v284, %v297
      %v300 = vmul.f32 %v290, %v298
      %v301 = vmul.f32 %v291, %v298
      %v302 = vmul.f32 %v292, %v298
      %v303 = vmul.f32 %v293, %v298
      %v305 = vlaneseq
      %v306 = vshrl.u32 %v305, 7
      %v307 = vsub.s32 0, %v306
      %v308 = vrot.slane %v285, %v307
      %v310 = vadd.f32 %v300, %v308
      %v311 = vadd.f32 %v301, %v308
      %v312 = vadd.f32 %v302, %v308
      %v313 = vadd.f32 %v303, %v308
      %v314 = vmax.f32 %v310, 0.0
      %v315 = vmax.f32 %v311, 0.0
      %v316 = vmax.f32 %v312, 0.0
      %v317 = vmax.f32 %v313, 0.0
      %v318 = vpack.c.bf16 %v315, %v314
      %v319 = vpack.c.bf16 %v317, %v316
      %s320 = scalar_lea.vmem %s3, 64
      %v321 = vld [vmem:[%s320] sm:$0xf]
      %v322 = vld [vmem:[%s320 + $0x4] sm:$0xf]
      %v323 = vld [vmem:[%s320 + $0x8] sm:$0xf]
      %v324 = vld [vmem:[%s320 + $0xc] sm:$0xf]
      %v325 = vld [vmem:[%s320 + $0x10] sm:$0xf]
      %v326 = vld [vmem:[%s320 + $0x14] sm:$0xf]
      %v327 = vld [vmem:[%s320 + $0x18] sm:$0xf]
      %v328 = vld [vmem:[%s320 + $0x1c] sm:$0xf]
      %v329 = vld [vmem:[%s320 + $0x20] sm:$0xf]
      %v330 = vld [vmem:[%s320 + $0x24] sm:$0xf]
      %v331 = vld [vmem:[%s320 + $0x28] sm:$0xf]
      %v332 = vld [vmem:[%s320 + $0x2c] sm:$0xf]
      %v333 = vld [vmem:[%s320 + $0x30] sm:$0xf]
      %v334 = vld [vmem:[%s320 + $0x34] sm:$0xf]
      %v335 = vld [vmem:[%s320 + $0x38] sm:$0xf]
      %v336 = vld [vmem:[%s320 + $0x3c] sm:$0xf]
      %vm337 = vsmask.f32 256
      %v339 = vshrl.u32 %v318, 16
      %v341 = vrot.slane %v339, 7
      %v342 = vshll.u32 %v318, 16
      %v344 = vor.u32 %v341, %v342
      %v346 = vshrl.u32 %v319, 16
      %v348 = vrot.slane %v346, 7
      %v349 = vshll.u32 %v319, 16
      %v351 = vor.u32 %v348, %v349
      %v352 = vsel %vm337, %v341, %v351
      %vm355 = vcmask 1040384
      %vm356 = vmand %vm355, %vm337
      %v357 = vsel %vm356, 0, %v344
      %vm358 = vsmask.f32 7424
      %v359 = vrot.slane %v342, 1
      %v360 = vor.u32 %v339, %v359
      %v361 = vrot.slane %v349, 1
      %v362 = vsel %vm358, %v360, %v361
      %v363 = vor.u32 %v346, %v361
      %vm366 = vcmask 1047552
      %vm367 = vmand %vm366, %vm358
      %v368 = vsel %vm367, %v363, 0
      %v369 = vld [vmem:[%s3] sm:$0xf]
      %v370 = vld [vmem:[%s3 + $0x4] sm:$0xf]
      %v371 = vld [vmem:[%s3 + $0x8] sm:$0xf]
      %v372 = vld [vmem:[%s3 + $0xc] sm:$0xf]
      %v373 = vld [vmem:[%s3 + $0x10] sm:$0xf]
      %v374 = vld [vmem:[%s3 + $0x14] sm:$0xf]
      %v375 = vld [vmem:[%s3 + $0x18] sm:$0xf]
      %v376 = vld [vmem:[%s3 + $0x1c] sm:$0xf]
      %v377 = vld [vmem:[%s3 + $0x20] sm:$0xf]
      %v378 = vld [vmem:[%s3 + $0x24] sm:$0xf]
      %v379 = vld [vmem:[%s3 + $0x28] sm:$0xf]
      %v380 = vld [vmem:[%s3 + $0x2c] sm:$0xf]
      %v381 = vld [vmem:[%s3 + $0x30] sm:$0xf]
      %v382 = vld [vmem:[%s3 + $0x34] sm:$0xf]
      %v383 = vld [vmem:[%s3 + $0x38] sm:$0xf]
      %v384 = vld [vmem:[%s3 + $0x3c] sm:$0xf]
      %v401 = vunpack.c.l.b16 %v369
      %v402 = vunpack.c.l.b16 %v370
      %v403 = vunpack.c.l.b16 %v371
      %v404 = vunpack.c.l.b16 %v372
      %v405 = vunpack.c.l.b16 %v373
      %v406 = vunpack.c.l.b16 %v374
      %v407 = vunpack.c.l.b16 %v375
      %v408 = vunpack.c.l.b16 %v376
      %v409 = vunpack.c.l.b16 %v377
      %v410 = vunpack.c.l.b16 %v378
      %v411 = vunpack.c.l.b16 %v379
      %v412 = vunpack.c.l.b16 %v380
      %v413 = vunpack.c.l.b16 %v381
      %v414 = vunpack.c.l.b16 %v382
      %v415 = vunpack.c.l.b16 %v383
      %v416 = vunpack.c.l.b16 %v384
      %v417 = vpack.c.b16 %v402, %v401
      %v418 = vpack.c.b16 %v404, %v403
      %v419 = vpack.c.b16 %v406, %v405
      %v420 = vpack.c.b16 %v408, %v407
      %v421 = vpack.c.b16 %v410, %v409
      %v422 = vpack.c.b16 %v412, %v411
      %v423 = vpack.c.b16 %v414, %v413
      %v424 = vpack.c.b16 %v416, %v415
      %433 = vmatprep.subr.bf16.mxu0 0
      %434 = vmatpush1.bf16.msra.mxu0 %v417
      %435 = vmatprep.subr.bf16.mxu0 0
      %436 = vmatpush1.bf16.msra.mxu0 %v418
      %437 = vmatprep.subr.bf16.mxu0 0
      %438 = vmatpush1.bf16.msra.mxu0 %v419
      %439 = vmatprep.subr.bf16.mxu0 0
      %440 = vmatpush1.bf16.msra.mxu0 %v420
      %441 = vmatprep.subr.bf16.mxu0 0
      %442 = vmatpush1.bf16.msra.mxu0 %v421
      %443 = vmatprep.subr.bf16.mxu0 0
      %444 = vmatpush1.bf16.msra.mxu0 %v422
      %445 = vmatprep.subr.bf16.mxu0 0
      %446 = vmatpush1.bf16.msra.mxu0 %v423
      %447 = vmatprep.subr.bf16.mxu0 0
      %448 = vmatpush1.bf16.msra.mxu0 %v424
      %449 = vmatprep.subr.bf16.mxu0 0
      %450 = vmatpush1.bf16.msra.mxu0 0
      %451 = vmatprep.subr.bf16.mxu0 0
      %452 = vmatpush1.bf16.msra.mxu0 0
      %453 = vmatprep.subr.bf16.mxu0 0
      %454 = vmatpush1.bf16.msra.mxu0 0
      %455 = vmatprep.subr.bf16.mxu0 0
      %456 = vmatpush1.bf16.msra.mxu0 0
      %457 = vmatprep.subr.bf16.mxu0 0
      %458 = vmatpush1.bf16.msra.mxu0 0
      %459 = vmatprep.subr.bf16.mxu0 0
      %460 = vmatpush1.bf16.msra.mxu0 0
      %461 = vmatprep.subr.bf16.mxu0 0
      %462 = vmatpush1.bf16.msra.mxu0 0
      %463 = vmatprep.subr.bf16.mxu0 0
      %464 = vmatpush1.bf16.msra.mxu0 0
      %465 = vmatprep.mubr.bf16.mxu0 0
      %466 = vmatmul.mubr.bf16.gmra.mrb[0].mxu0 %v357
      %v467 = vpop.f32.mrb[0].mxu0
      %v468 = vadd.f32 0.0, %v467
      %v469 = vpop.f32.mrb[0].mxu0
      %v470 = vpop.f32.mrb[0].mxu0
      %v471 = vadd.f32 0.0, %v470
      %v472 = vpop.f32.mrb[0].mxu0
      %473 = vmatprep.mubr.bf16.mxu0 0
      %474 = vmatmul.mubr.bf16.gmra.mrb[0].mxu0 %v352
      %v475 = vpop.f32.mrb[0].mxu0
      %v476 = vadd.f32 0.0, %v475
      %v477 = vpop.f32.mrb[0].mxu0
      %v478 = vpop.f32.mrb[0].mxu0
      %v479 = vadd.f32 0.0, %v478
      %v480 = vpop.f32.mrb[0].mxu0
      %481 = vdwg.mxu0
      %v498 = vunpack.c.l.b16 %v321
      %v499 = vunpack.c.l.b16 %v322
      %v500 = vunpack.c.l.b16 %v323
      %v501 = vunpack.c.l.b16 %v324
      %v502 = vunpack.c.l.b16 %v325
      %v503 = vunpack.c.l.b16 %v326
      %v504 = vunpack.c.l.b16 %v327
      %v505 = vunpack.c.l.b16 %v328
      %v506 = vunpack.c.l.b16 %v329
      %v507 = vunpack.c.l.b16 %v330
      %v508 = vunpack.c.l.b16 %v331
      %v509 = vunpack.c.l.b16 %v332
      %v510 = vunpack.c.l.b16 %v333
      %v511 = vunpack.c.l.b16 %v334
      %v512 = vunpack.c.l.b16 %v335
      %v513 = vunpack.c.l.b16 %v336
      %v514 = vpack.c.b16 %v499, %v498
      %v515 = vpack.c.b16 %v501, %v500
      %v516 = vpack.c.b16 %v503, %v502
      %v517 = vpack.c.b16 %v505, %v504
      %v518 = vpack.c.b16 %v507, %v506
      %v519 = vpack.c.b16 %v509, %v508
      %v520 = vpack.c.b16 %v511, %v510
      %v521 = vpack.c.b16 %v513, %v512
      %530 = vmatprep.subr.bf16.mxu0 0
      %531 = vmatpush1.bf16.msra.mxu0 %v514
      %532 = vmatprep.subr.bf16.mxu0 0
      %533 = vmatpush1.bf16.msra.mxu0 %v515
      %534 = vmatprep.subr.bf16.mxu0 0
      %535 = vmatpush1.bf16.msra.mxu0 %v516
      %536 = vmatprep.subr.bf16.mxu0 0
      %537 = vmatpush1.bf16.msra.mxu0 %v517
      %538 = vmatprep.subr.bf16.mxu0 0
      %539 = vmatpush1.bf16.msra.mxu0 %v518
      %540 = vmatprep.subr.bf16.mxu0 0
      %541 = vmatpush1.bf16.msra.mxu0 %v519
      %542 = vmatprep.subr.bf16.mxu0 0
      %543 = vmatpush1.bf16.msra.mxu0 %v520
      %544 = vmatprep.subr.bf16.mxu0 0
      %545 = vmatpush1.bf16.msra.mxu0 %v521
      %546 = vmatprep.subr.bf16.mxu0 0
      %547 = vmatpush1.bf16.msra.mxu0 0
      %548 = vmatprep.subr.bf16.mxu0 0
      %549 = vmatpush1.bf16.msra.mxu0 0
      %550 = vmatprep.subr.bf16.mxu0 0
      %551 = vmatpush1.bf16.msra.mxu0 0
      %552 = vmatprep.subr.bf16.mxu0 0
      %553 = vmatpush1.bf16.msra.mxu0 0
      %554 = vmatprep.subr.bf16.mxu0 0
      %555 = vmatpush1.bf16.msra.mxu0 0
      %556 = vmatprep.subr.bf16.mxu0 0
      %557 = vmatpush1.bf16.msra.mxu0 0
      %558 = vmatprep.subr.bf16.mxu0 0
      %559 = vmatpush1.bf16.msra.mxu0 0
      %560 = vmatprep.subr.bf16.mxu0 0
      %561 = vmatpush1.bf16.msra.mxu0 0
      %562 = vmatprep.mubr.bf16.mxu0 0
      %563 = vmatmul.mubr.bf16.gmra.mrb[0].mxu0 %v318
      %v564 = vpop.f32.mrb[0].mxu0
      %v565 = vadd.f32 %v468, %v564
      %v566 = vpop.f32.mrb[0].mxu0
      %v567 = vpop.f32.mrb[0].mxu0
      %v568 = vadd.f32 %v471, %v567
      %v569 = vpop.f32.mrb[0].mxu0
      %570 = vmatprep.mubr.bf16.mxu0 0
      %571 = vmatmul.mubr.bf16.gmra.mrb[0].mxu0 %v319
      %v572 = vpop.f32.mrb[0].mxu0
      %v573 = vadd.f32 %v476, %v572
      %v574 = vpop.f32.mrb[0].mxu0
      %v575 = vpop.f32.mrb[0].mxu0
      %v576 = vadd.f32 %v479, %v575
      %v577 = vpop.f32.mrb[0].mxu0
      %578 = vdwg.mxu0
      %s579 = scalar_lea.vmem %s3, 128
      %v580 = vld [vmem:[%s579] sm:$0xf]
      %v581 = vld [vmem:[%s579 + $0x4] sm:$0xf]
      %v582 = vld [vmem:[%s579 + $0x8] sm:$0xf]
      %v583 = vld [vmem:[%s579 + $0xc] sm:$0xf]
      %v584 = vld [vmem:[%s579 + $0x10] sm:$0xf]
      %v585 = vld [vmem:[%s579 + $0x14] sm:$0xf]
      %v586 = vld [vmem:[%s579 + $0x18] sm:$0xf]
      %v587 = vld [vmem:[%s579 + $0x1c] sm:$0xf]
      %v588 = vld [vmem:[%s579 + $0x20] sm:$0xf]
      %v589 = vld [vmem:[%s579 + $0x24] sm:$0xf]
      %v590 = vld [vmem:[%s579 + $0x28] sm:$0xf]
      %v591 = vld [vmem:[%s579 + $0x2c] sm:$0xf]
      %v592 = vld [vmem:[%s579 + $0x30] sm:$0xf]
      %v593 = vld [vmem:[%s579 + $0x34] sm:$0xf]
      %v594 = vld [vmem:[%s579 + $0x38] sm:$0xf]
      %v595 = vld [vmem:[%s579 + $0x3c] sm:$0xf]
      %v612 = vunpack.c.l.b16 %v580
      %v613 = vunpack.c.l.b16 %v581
      %v614 = vunpack.c.l.b16 %v582
      %v615 = vunpack.c.l.b16 %v583
      %v616 = vunpack.c.l.b16 %v584
      %v617 = vunpack.c.l.b16 %v585
      %v618 = vunpack.c.l.b16 %v586
      %v619 = vunpack.c.l.b16 %v587
      %v620 = vunpack.c.l.b16 %v588
      %v621 = vunpack.c.l.b16 %v589
      %v622 = vunpack.c.l.b16 %v590
      %v623 = vunpack.c.l.b16 %v591
      %v624 = vunpack.c.l.b16 %v592
      %v625 = vunpack.c.l.b16 %v593
      %v626 = vunpack.c.l.b16 %v594
      %v627 = vunpack.c.l.b16 %v595
      %v628 = vpack.c.b16 %v613, %v612
      %v629 = vpack.c.b16 %v615, %v614
      %v630 = vpack.c.b16 %v617, %v616
      %v631 = vpack.c.b16 %v619, %v618
      %v632 = vpack.c.b16 %v621, %v620
      %v633 = vpack.c.b16 %v623, %v622
      %v634 = vpack.c.b16 %v625, %v624
      %v635 = vpack.c.b16 %v627, %v626
      %644 = vmatprep.subr.bf16.mxu0 0
      %645 = vmatpush1.bf16.msra.mxu0 %v628
      %646 = vmatprep.subr.bf16.mxu0 0
      %647 = vmatpush1.bf16.msra.mxu0 %v629
      %648 = vmatprep.subr.bf16.mxu0 0
      %649 = vmatpush1.bf16.msra.mxu0 %v630
      %650 = vmatprep.subr.bf16.mxu0 0
      %651 = vmatpush1.bf16.msra.mxu0 %v631
      %652 = vmatprep.subr.bf16.mxu0 0
      %653 = vmatpush1.bf16.msra.mxu0 %v632
      %654 = vmatprep.subr.bf16.mxu0 0
      %655 = vmatpush1.bf16.msra.mxu0 %v633
      %656 = vmatprep.subr.bf16.mxu0 0
      %657 = vmatpush1.bf16.msra.mxu0 %v634
      %658 = vmatprep.subr.bf16.mxu0 0
      %659 = vmatpush1.bf16.msra.mxu0 %v635
      %660 = vmatprep.subr.bf16.mxu0 0
      %661 = vmatpush1.bf16.msra.mxu0 0
      %662 = vmatprep.subr.bf16.mxu0 0
      %663 = vmatpush1.bf16.msra.mxu0 0
      %664 = vmatprep.subr.bf16.mxu0 0
      %665 = vmatpush1.bf16.msra.mxu0 0
      %666 = vmatprep.subr.bf16.mxu0 0
      %667 = vmatpush1.bf16.msra.mxu0 0
      %668 = vmatprep.subr.bf16.mxu0 0
      %669 = vmatpush1.bf16.msra.mxu0 0
      %670 = vmatprep.subr.bf16.mxu0 0
      %671 = vmatpush1.bf16.msra.mxu0 0
      %672 = vmatprep.subr.bf16.mxu0 0
      %673 = vmatpush1.bf16.msra.mxu0 0
      %674 = vmatprep.subr.bf16.mxu0 0
      %675 = vmatpush1.bf16.msra.mxu0 0
      %676 = vmatprep.mubr.bf16.mxu0 0
      %677 = vmatmul.mubr.bf16.gmra.mrb[0].mxu0 %v362
      %v678 = vpop.f32.mrb[0].mxu0
      %v679 = vadd.f32 0.0, %v678
      %v680 = vpop.f32.mrb[0].mxu0
      %v681 = vpop.f32.mrb[0].mxu0
      %v682 = vadd.f32 0.0, %v681
      %v683 = vpop.f32.mrb[0].mxu0
      %684 = vmatprep.mubr.bf16.mxu0 0
      %685 = vmatmul.mubr.bf16.gmra.mrb[0].mxu0 %v368
      %v686 = vpop.f32.mrb[0].mxu0
      %v687 = vadd.f32 0.0, %v686
      %v688 = vpop.f32.mrb[0].mxu0
      %v689 = vpop.f32.mrb[0].mxu0
      %v690 = vadd.f32 0.0, %v689
      %v691 = vpop.f32.mrb[0].mxu0
      %692 = vdwg.mxu0
      %v693 = vadd.f32 %v565, %v679
      %v694 = vadd.f32 %v568, %v682
      %v695 = vadd.f32 %v573, %v687
      %v696 = vadd.f32 %v576, %v690
      %697 = vst [vmem:[%s274] sm:$0xff] %v693
      %698 = vst [vmem:[%s274 + $0x8] sm:$0xff] %v694
      %699 = vst [vmem:[%s274 + $0x10] sm:$0xff] %v695
      %700 = vst [vmem:[%s274 + $0x18] sm:$0xff] %v696
      %v701 = vadd.f32 %v693, %v694
      %v702 = vadd.f32 %v701, %v695
      %v703 = vadd.f32 %v702, %v696
      %v704 = vrot.slane %v703, 4
      %v705 = vadd.f32 %v703, %v704
      %v706 = vrot.slane %v705, 2
      %v707 = vadd.f32 %v705, %v706
      %v708 = vrot.slane %v707, 1
      %v709 = vadd.f32 %v707, %v708
      %v710 = vmul.f32 %v693, %v693
      %v711 = vmul.f32 %v694, %v694
      %v712 = vmul.f32 %v695, %v695
      %v713 = vmul.f32 %v696, %v696
      %v714 = vadd.f32 %v710, %v711
      %v715 = vadd.f32 %v714, %v712
      %v716 = vadd.f32 %v715, %v713
      %v717 = vrot.slane %v716, 4
      %v718 = vadd.f32 %v716, %v717
      %v719 = vrot.slane %v718, 2
      %v720 = vadd.f32 %v718, %v719
      %v721 = vrot.slane %v720, 1
      %v722 = vadd.f32 %v720, %v721
      %vm723 = vcmask 1040384
      %v724 = vsel %vm723, %v709, %v722
      %vm725 = vcmask 1041408
      %v726 = vsel %vm725, %v724, 0.0
      %727 = vst [vmem:[%s282] sm:$0xff] %v726
      %s728 = smul.u32 4, %s22
      %p729 = scmp.lt.s32.totalorder %s21, 1
      %s730 = scalar_select %p729, %s21, 1
      %p731 = scmp.lt.s32.totalorder %s728, 3
      %s732 = scalar_select %p731, %s728, 3
      %s733 = smul.addr %s730, 4
      %s734 = sadd.s32 %s732, %s733
      %s735 = smul.addr %s734, 8
      %s736 = scalar_lea.vmem %s4, %s735
      %p737 = scmp.lt.s32.totalorder %s21, 1
      %s738 = scalar_select %p737, %s21, 1
      %p739 = scmp.lt.s32.totalorder %s22, 0
      %s740 = scalar_select %p739, %s22, 0
      %s741 = sadd.s32 %s740, %s738
      %s742 = smul.addr %s741, 8
      %s743 = scalar_lea.vmem %s5, %s742
      // Predicated region
      $region37: #{double_conv.3} parent=35 // pred_check
        %p744 = pneg %p140
      $region38: #{double_conv.3} parent=35 // pred_check_branch
        %746 = sbr.rel (%p744) target = $region40
      $region39: #{double_conv.3} parent=35 // pred_region
        %s747 = smul.u32 4, %s22
      $region40: #{double_conv.3} parent=35 // pred_fallthru
        _
      // Predicated region
      $region41: #{double_conv.3} parent=35 // pred_check
        %p748 = pneg %p168
      $region42: #{double_conv.3} parent=35 // pred_check_branch
        %750 = sbr.rel (%p748) target = $region44
      $region43: #{double_conv.3} parent=35 // pred_region
        _
      $region44: #{double_conv.3} parent=35 // pred_fallthru
        _
    $region36: #{double_conv.3} parent=5 // pred_fallthru
      _
    %p751 = scmp.le.s32.totalorder 2, %s12
    // Predicated region
    $region45: #{double_conv.3} parent=5 // pred_check
      %p752 = pneg %p751
    $region46: #{double_conv.3} parent=5 // pred_check_branch
      %754 = sbr.rel (%p752) target = $region48
    $region47: #{double_conv.3} parent=5 // pred_region
      %s755 = ssub.s32 %s12, 2
      // Predicated region
      $region49: #{double_conv.3} parent=47 // pred_check
        %p756 = pneg %p146
      $region50: #{double_conv.3} parent=47 // pred_check_branch
        %758 = sbr.rel (%p756) target = $region52
      $region51: #{double_conv.3} parent=47 // pred_region
        %s759 = smul.u32 4, %s24
        %p760 = scmp.lt.s32.totalorder %s23, 1
        %s761 = scalar_select %p760, %s23, 1
        %p762 = scmp.lt.s32.totalorder %s759, 3
        %s763 = scalar_select %p762, %s759, 3
        %s764 = smul.addr %s761, 4
        %s765 = sadd.s32 %s763, %s764
        %s766 = smul.addr %s765, 8
        %s767 = scalar_lea.vmem %s4, %s766
      $region52: #{double_conv.3} parent=47 // pred_fallthru
        _
      // Predicated region
      $region53: #{double_conv.3} parent=47 // pred_check
        %p768 = pneg %p174
      $region54: #{double_conv.3} parent=47 // pred_check_branch
        %770 = sbr.rel (%p768) target = $region56
      $region55: #{double_conv.3} parent=47 // pred_region
        %p771 = scmp.lt.s32.totalorder %s23, 1
        %s772 = scalar_select %p771, %s23, 1
        %p773 = scmp.lt.s32.totalorder %s24, 0
        %s774 = scalar_select %p773, %s24, 0
        %s775 = sadd.s32 %s774, %s772
        %s776 = smul.addr %s775, 8
        %s777 = scalar_lea.vmem %s5, %s776
      $region56: #{double_conv.3} parent=47 // pred_fallthru
        _
    $region48: #{double_conv.3} parent=5 // pred_fallthru
      _
  $region6: #{double_conv.3} parent=0 // loop_footer
    %s16 = sadd.s32 1, %s12
  $region7: #{double_conv.3} parent=0 // loop_footer_branch
    %11 = sbr.rel target = $region3
  $region8: #{double_conv.3} parent=0 // loop_exit
    _

</llo_original>
